<compile_context>
chip_gen: v7x
topology: tpu7x:2x2x1
jax: 0.10.0
libtpu: 0.0.40
codegen_flags: <defaults>
</compile_context>

<pallas_src>
import functools

import jax
import jax.numpy as jnp
from jax.experimental import pallas as pl
from jax.experimental.pallas import tpu as pltpu

LANE = 128  # TPU lane width: all feature/hidden/class dims padded to this.


# ----------------------------------------------------------------------------
# Fused whole-network kernel
# ----------------------------------------------------------------------------
def _net_kernel(train, *refs):
    """Fused forward. All refs are whole-array VMEM blocks.

    a_ref : [Npad, Npad] bf16   normalized adjacency (shared by all 3 GCN layers)
    x_ref : [Npad, LANE] bf16   zero-padded node features
    w_ref : [6, LANE, LANE] bf16  (wc1, wc2, wc3, wf1, wf2, wf3)
    b_ref : [6, 1, LANE] f32      (bc1, bc2, bc3, bf1, bf2, bf3-with-sentinel)
    m_ref : [2, Npad, 1] f32      per-node keep masks (train only)
    o_ref : [Npad, LANE] f32      log-softmax output (lane-dense store)
    """
    if train:
        a_ref, x_ref, w_ref, b_ref, m_ref, o_ref = refs
    else:
        a_ref, x_ref, w_ref, b_ref, o_ref = refs

    a = a_ref[...]  # bf16 [Npad, Npad]

    def gcn(x, i):
        xw = jnp.dot(x.astype(jnp.bfloat16), w_ref[i],
                     preferred_element_type=jnp.float32)
        return jnp.dot(a, xw.astype(jnp.bfloat16),
                       preferred_element_type=jnp.float32) + b_ref[i]

    def fc(x, i):
        return jnp.dot(x.astype(jnp.bfloat16), w_ref[i],
                       preferred_element_type=jnp.float32) + b_ref[i]

    x = x_ref[...]
    if train:
        # Matches torch reference: bernoulli node mask (no 1/(1-p) rescale) + residuals.
        y1 = jnp.maximum(gcn(x, 0), 0.0)
        y = m_ref[0] * y1                       # [Npad,1] lane-broadcast, f32
        y2 = jnp.maximum(gcn(y, 1) + y1, 0.0)
        y = m_ref[1] * y2
        y = jnp.maximum(gcn(y, 2) + y2, 0.0)
    else:
        y = jnp.maximum(gcn(x, 0), 0.0)
        y = jnp.maximum(gcn(y, 1), 0.0)
        y = jnp.maximum(gcn(y, 2), 0.0)

    y = jnp.maximum(fc(y, 3), 0.0)
    y = jnp.maximum(fc(y, 4), 0.0)
    # Padded class columns: zero W_f3 columns contribute 0 and b_f3's padded
    # columns hold the -1e30 sentinel, so no extra masking is needed here.
    logits = fc(y, 5)

    m = jnp.max(logits, axis=-1, keepdims=True)
    lse = m + jnp.log(jnp.sum(jnp.exp(logits - m), axis=-1, keepdims=True))
    o_ref[...] = logits - lse  # lane-dense [Npad, LANE] f32 store


# ----------------------------------------------------------------------------
# One-time packing / padding (cache these; do NOT redo per forward step)
# ----------------------------------------------------------------------------
def _round_up(v, m):
    return (v + m - 1) // m * m


def pack_params(params):
    """Pad every weight/bias to LANE, stack into two slabs, bake the softmax
    sentinel into the padded class columns of b_f3."""
    order = (("w_c1", "b_c1"), ("w_c2", "b_c2"), ("w_c3", "b_c3"),
             ("w_f1", "b_f1"), ("w_f2", "b_f2"), ("w_f3", "b_f3"))
    n_classes = params["w_f3"].shape[1]
    ws, bs = [], []
    for wn, bn in order:
        w, b = params[wn], params[bn]
        ws.append(jnp.pad(w, ((0, LANE - w.shape[0]), (0, LANE - w.shape[1]))))
        bs.append(jnp.pad(b, (0, LANE - b.shape[0])))
    # -1e30 sentinel in padded class columns (matmul contribution there is 0).
    col = jnp.arange(LANE)
    bs[5] = jnp.where(col < n_classes, bs[5], jnp.float32(-1e30))

    w_slab = jnp.stack(ws).astype(jnp.bfloat16)                    # [6,LANE,LANE]
    b_slab = jnp.stack(bs).astype(jnp.float32).reshape(6, 1, LANE)  # [6,1,LANE]
    return {"w": w_slab, "b": b_slab, "n_classes": n_classes}


def prepare_graph(a_hat, x):
    """Pad node dim to a multiple of 128 and cast the matmul operands to bf16."""
    n = a_hat.shape[0]
    npad = _round_up(n, LANE)
    a_pad = jnp.pad(a_hat, ((0, npad - n), (0, npad - n))).astype(jnp.bfloat16)
    x_pad = jnp.pad(x, ((0, npad - n), (0, LANE - x.shape[1]))).astype(jnp.bfloat16)
    return a_pad, x_pad


# ----------------------------------------------------------------------------
# Network forward (mirrors Net.forward)
# ----------------------------------------------------------------------------
@functools.partial(jax.jit, static_argnames=("train", "droprate"))
def _forward_padded(w_slab, b_slab, a_pad, x_pad, *, train, droprate=0.5, key=None):
    npad = a_pad.shape[0]
    inputs = [a_pad, x_pad, w_slab, b_slab]
    if train:
        k1, k2 = jax.random.split(key)
        # torch.bernoulli(ones(N,1) * (1 - droprate)) -- per-node keep mask, no rescale.
        m1 = jax.random.bernoulli(k1, 1.0 - droprate, (npad, 1)).astype(jnp.float32)
        m2 = jax.random.bernoulli(k2, 1.0 - droprate, (npad, 1)).astype(jnp.float32)
        inputs.append(jnp.stack([m1, m2]))  # [2, Npad, 1], broadcast in-kernel

    return pl.pallas_call(
        functools.partial(_net_kernel, train),
        out_shape=jax.ShapeDtypeStruct((npad, LANE), jnp.float32),
        in_specs=[pl.BlockSpec(memory_space=pltpu.MemorySpace.VMEM)] * len(inputs),
        out_specs=pl.BlockSpec(memory_space=pltpu.MemorySpace.VMEM),
        compiler_params=pltpu.CompilerParams(vmem_limit_bytes=8 * 1024 * 1024),
    )(*inputs)


def net_forward(packed, a_pad, x_pad, n_nodes, train, droprate=0.5, key=None):
    if train and key is None:
        raise ValueError("train=True requires a PRNG key for node dropout")
    out = _forward_padded(packed["w"], packed["b"], a_pad, x_pad,
                          train=train, droprate=droprate, key=key)
    return out[:n_nodes, :packed["n_classes"]]


# ----------------------------------------------------------------------------
# Deterministic setup (synthetic graph + parameters)
# ----------------------------------------------------------------------------
def glorot(key, shape):
    lim = jnp.sqrt(6.0 / (shape[0] + shape[1]))
    return jax.random.uniform(key, shape, jnp.float32, -lim, lim)


def linear_init(key, f_in, f_out):
    kw, kb = jax.random.split(key)
    lim = 1.0 / jnp.sqrt(f_in)
    w = jax.random.uniform(kw, (f_in, f_out), jnp.float32, -lim, lim)
    b = jax.random.uniform(kb, (f_out,), jnp.float32, -lim, lim)
    return w, b


def make_params(key, n_features, n_hidden, n_classes):
    keys = jax.random.split(key, 6)
    p = {}
    p["w_c1"] = glorot(keys[0], (n_features, n_hidden))
    p["b_c1"] = jnp.zeros((n_hidden,), jnp.float32)
    p["w_c2"] = glorot(keys[1], (n_hidden, n_hidden))
    p["b_c2"] = jnp.zeros((n_hidden,), jnp.float32)
    p["w_c3"] = glorot(keys[2], (n_hidden, n_hidden))
    p["b_c3"] = jnp.zeros((n_hidden,), jnp.float32)
    p["w_f1"], p["b_f1"] = linear_init(keys[3], n_hidden, n_hidden)
    p["w_f2"], p["b_f2"] = linear_init(keys[4], n_hidden, n_hidden)
    p["w_f3"], p["b_f3"] = linear_init(keys[5], n_hidden, n_classes)
    return p


def make_graph(key, n_nodes, n_edges):
    """Random undirected graph -> symmetrically normalized dense adjacency."""
    ks, kd = jax.random.split(key)
    src = jax.random.randint(ks, (n_edges,), 0, n_nodes)
    dst = jax.random.randint(kd, (n_edges,), 0, n_nodes)
    adj = jnp.zeros((n_nodes, n_nodes), jnp.float32)
    adj = adj.at[src, dst].set(1.0)
    adj = jnp.maximum(adj, adj.T)                      # undirected
    adj = adj + jnp.eye(n_nodes, dtype=jnp.float32)    # self loops
    deg = jnp.sum(adj, axis=1)
    d_inv_sqrt = 1.0 / jnp.sqrt(deg)
    a_hat = adj * d_inv_sqrt[:, None] * d_inv_sqrt[None, :]
    return a_hat


if __name__ == "__main__":
    N_NODES = 64
    N_FEATURES = 16
    N_HIDDEN = 32
    N_CLASSES = 7
    DROPRATE = 0.5

    root = jax.random.PRNGKey(0)
    k_x, k_g, k_p, k_drop = jax.random.split(root, 4)

    x = jax.random.normal(k_x, (N_NODES, N_FEATURES), jnp.float32)
    a_hat = make_graph(k_g, N_NODES, n_edges=256)
    params = make_params(k_p, N_FEATURES, N_HIDDEN, N_CLASSES)

    # One-time packing/padding (cached outside the per-step forward).
    packed = pack_params(params)
    a_pad, x_pad = prepare_graph(a_hat, x)

    # Inference path (TRAIN=False)
    out_eval = net_forward(packed, a_pad, x_pad, N_NODES, train=False)
    out_eval = jax.block_until_ready(out_eval)

    # Training path (TRAIN=True) with node dropout + residuals
    out_train = net_forward(packed, a_pad, x_pad, N_NODES, train=True,
                            droprate=DROPRATE, key=k_drop)
    out_train = jax.block_until_ready(out_train)

    # Sanity: log_softmax rows must exponentiate to probability distributions.
    row_sums = jnp.exp(out_eval).sum(axis=1)
    assert out_eval.shape == (N_NODES, N_CLASSES)
    assert out_train.shape == (N_NODES, N_CLASSES)
    assert bool(jnp.all(jnp.abs(row_sums - 1.0) < 1e-4))

    print("KERNEL_OK")
</pallas_src>

<mosaic_0001>
module attributes {stable_mosaic.version = 11 : i64} {
  func.func @_net_kernel(%arg0: memref<128x128xbf16, #tpu.memory_space<vmem>>, %arg1: memref<128x128xbf16, #tpu.memory_space<vmem>>, %arg2: memref<6x128x128xbf16, #tpu.memory_space<vmem>>, %arg3: memref<6x1x128xf32, #tpu.memory_space<vmem>>, %arg4: memref<128x128xf32, #tpu.memory_space<vmem>>) attributes {dimension_semantics = [], scalar_prefetch = 0 : i64, scratch_operands = 0 : i64, tpu.core_type = #tpu.core_type<tc>} {
    %c0 = arith.constant 0 : index
    %c0_0 = arith.constant 0 : index
    %0 = vector.load %arg0[%c0, %c0_0] : memref<128x128xbf16, #tpu.memory_space<vmem>>, vector<128x128xbf16>
    %c0_1 = arith.constant 0 : index
    %c0_2 = arith.constant 0 : index
    %1 = vector.load %arg1[%c0_1, %c0_2] : memref<128x128xbf16, #tpu.memory_space<vmem>>, vector<128x128xbf16>
    %c0_3 = arith.constant 0 : index
    %c0_4 = arith.constant 0 : index
    %c0_5 = arith.constant 0 : index
    %2 = vector.load %arg2[%c0_3, %c0_4, %c0_5] : memref<6x128x128xbf16, #tpu.memory_space<vmem>>, vector<1x128x128xbf16>
    %3 = vector.shape_cast %2 : vector<1x128x128xbf16> to vector<128x128xbf16>
    %cst = arith.constant dense<0.000000e+00> : vector<128x128xf32>
    %4 = tpu.matmul %1, %3, %cst {dimension_numbers = #tpu.dot_dimension_numbers<[1], [0], [0], [1], [0, 0, 1, 1], [], []>} : vector<128x128xbf16>, vector<128x128xbf16>, vector<128x128xf32> -> vector<128x128xf32>
    %5 = arith.truncf %4 : vector<128x128xf32> to vector<128x128xbf16>
    %cst_6 = arith.constant dense<0.000000e+00> : vector<128x128xf32>
    %6 = tpu.matmul %0, %5, %cst_6 {dimension_numbers = #tpu.dot_dimension_numbers<[1], [0], [0], [1], [0, 0, 1, 1], [], []>} : vector<128x128xbf16>, vector<128x128xbf16>, vector<128x128xf32> -> vector<128x128xf32>
    %c0_7 = arith.constant 0 : index
    %c0_8 = arith.constant 0 : index
    %c0_9 = arith.constant 0 : index
    %7 = vector.load %arg3[%c0_7, %c0_8, %c0_9] : memref<6x1x128xf32, #tpu.memory_space<vmem>>, vector<1x1x128xf32>
    %8 = vector.shape_cast %7 : vector<1x1x128xf32> to vector<1x128xf32>
    %9 = vector.broadcast %8 : vector<1x128xf32> to vector<128x128xf32>
    %10 = arith.addf %6, %9 : vector<128x128xf32>
    %cst_10 = arith.constant 0.000000e+00 : f32
    %11 = vector.broadcast %cst_10 : f32 to vector<128x128xf32>
    %12 = arith.maximumf %10, %11 : vector<128x128xf32>
    %13 = arith.truncf %12 : vector<128x128xf32> to vector<128x128xbf16>
    %c1 = arith.constant 1 : index
    %c0_11 = arith.constant 0 : index
    %c0_12 = arith.constant 0 : index
    %14 = vector.load %arg2[%c1, %c0_11, %c0_12] : memref<6x128x128xbf16, #tpu.memory_space<vmem>>, vector<1x128x128xbf16>
    %15 = vector.shape_cast %14 : vector<1x128x128xbf16> to vector<128x128xbf16>
    %cst_13 = arith.constant dense<0.000000e+00> : vector<128x128xf32>
    %16 = tpu.matmul %13, %15, %cst_13 {dimension_numbers = #tpu.dot_dimension_numbers<[1], [0], [0], [1], [0, 0, 1, 1], [], []>} : vector<128x128xbf16>, vector<128x128xbf16>, vector<128x128xf32> -> vector<128x128xf32>
    %17 = arith.truncf %16 : vector<128x128xf32> to vector<128x128xbf16>
    %cst_14 = arith.constant dense<0.000000e+00> : vector<128x128xf32>
    %18 = tpu.matmul %0, %17, %cst_14 {dimension_numbers = #tpu.dot_dimension_numbers<[1], [0], [0], [1], [0, 0, 1, 1], [], []>} : vector<128x128xbf16>, vector<128x128xbf16>, vector<128x128xf32> -> vector<128x128xf32>
    %c1_15 = arith.constant 1 : index
    %c0_16 = arith.constant 0 : index
    %c0_17 = arith.constant 0 : index
    %19 = vector.load %arg3[%c1_15, %c0_16, %c0_17] : memref<6x1x128xf32, #tpu.memory_space<vmem>>, vector<1x1x128xf32>
    %20 = vector.shape_cast %19 : vector<1x1x128xf32> to vector<1x128xf32>
    %21 = vector.broadcast %20 : vector<1x128xf32> to vector<128x128xf32>
    %22 = arith.addf %18, %21 : vector<128x128xf32>
    %cst_18 = arith.constant 0.000000e+00 : f32
    %23 = vector.broadcast %cst_18 : f32 to vector<128x128xf32>
    %24 = arith.maximumf %22, %23 : vector<128x128xf32>
    %25 = arith.truncf %24 : vector<128x128xf32> to vector<128x128xbf16>
    %c2 = arith.constant 2 : index
    %c0_19 = arith.constant 0 : index
    %c0_20 = arith.constant 0 : index
    %26 = vector.load %arg2[%c2, %c0_19, %c0_20] : memref<6x128x128xbf16, #tpu.memory_space<vmem>>, vector<1x128x128xbf16>
    %27 = vector.shape_cast %26 : vector<1x128x128xbf16> to vector<128x128xbf16>
    %cst_21 = arith.constant dense<0.000000e+00> : vector<128x128xf32>
    %28 = tpu.matmul %25, %27, %cst_21 {dimension_numbers = #tpu.dot_dimension_numbers<[1], [0], [0], [1], [0, 0, 1, 1], [], []>} : vector<128x128xbf16>, vector<128x128xbf16>, vector<128x128xf32> -> vector<128x128xf32>
    %29 = arith.truncf %28 : vector<128x128xf32> to vector<128x128xbf16>
    %cst_22 = arith.constant dense<0.000000e+00> : vector<128x128xf32>
    %30 = tpu.matmul %0, %29, %cst_22 {dimension_numbers = #tpu.dot_dimension_numbers<[1], [0], [0], [1], [0, 0, 1, 1], [], []>} : vector<128x128xbf16>, vector<128x128xbf16>, vector<128x128xf32> -> vector<128x128xf32>
    %c2_23 = arith.constant 2 : index
    %c0_24 = arith.constant 0 : index
    %c0_25 = arith.constant 0 : index
    %31 = vector.load %arg3[%c2_23, %c0_24, %c0_25] : memref<6x1x128xf32, #tpu.memory_space<vmem>>, vector<1x1x128xf32>
    %32 = vector.shape_cast %31 : vector<1x1x128xf32> to vector<1x128xf32>
    %33 = vector.broadcast %32 : vector<1x128xf32> to vector<128x128xf32>
    %34 = arith.addf %30, %33 : vector<128x128xf32>
    %cst_26 = arith.constant 0.000000e+00 : f32
    %35 = vector.broadcast %cst_26 : f32 to vector<128x128xf32>
    %36 = arith.maximumf %34, %35 : vector<128x128xf32>
    %37 = arith.truncf %36 : vector<128x128xf32> to vector<128x128xbf16>
    %c3 = arith.constant 3 : index
    %c0_27 = arith.constant 0 : index
    %c0_28 = arith.constant 0 : index
    %38 = vector.load %arg2[%c3, %c0_27, %c0_28] : memref<6x128x128xbf16, #tpu.memory_space<vmem>>, vector<1x128x128xbf16>
    %39 = vector.shape_cast %38 : vector<1x128x128xbf16> to vector<128x128xbf16>
    %cst_29 = arith.constant dense<0.000000e+00> : vector<128x128xf32>
    %40 = tpu.matmul %37, %39, %cst_29 {dimension_numbers = #tpu.dot_dimension_numbers<[1], [0], [0], [1], [0, 0, 1, 1], [], []>} : vector<128x128xbf16>, vector<128x128xbf16>, vector<128x128xf32> -> vector<128x128xf32>
    %c3_30 = arith.constant 3 : index
    %c0_31 = arith.constant 0 : index
    %c0_32 = arith.constant 0 : index
    %41 = vector.load %arg3[%c3_30, %c0_31, %c0_32] : memref<6x1x128xf32, #tpu.memory_space<vmem>>, vector<1x1x128xf32>
    %42 = vector.shape_cast %41 : vector<1x1x128xf32> to vector<1x128xf32>
    %43 = vector.broadcast %42 : vector<1x128xf32> to vector<128x128xf32>
    %44 = arith.addf %40, %43 : vector<128x128xf32>
    %cst_33 = arith.constant 0.000000e+00 : f32
    %45 = vector.broadcast %cst_33 : f32 to vector<128x128xf32>
    %46 = arith.maximumf %44, %45 : vector<128x128xf32>
    %47 = arith.truncf %46 : vector<128x128xf32> to vector<128x128xbf16>
    %c4 = arith.constant 4 : index
    %c0_34 = arith.constant 0 : index
    %c0_35 = arith.constant 0 : index
    %48 = vector.load %arg2[%c4, %c0_34, %c0_35] : memref<6x128x128xbf16, #tpu.memory_space<vmem>>, vector<1x128x128xbf16>
    %49 = vector.shape_cast %48 : vector<1x128x128xbf16> to vector<128x128xbf16>
    %cst_36 = arith.constant dense<0.000000e+00> : vector<128x128xf32>
    %50 = tpu.matmul %47, %49, %cst_36 {dimension_numbers = #tpu.dot_dimension_numbers<[1], [0], [0], [1], [0, 0, 1, 1], [], []>} : vector<128x128xbf16>, vector<128x128xbf16>, vector<128x128xf32> -> vector<128x128xf32>
    %c4_37 = arith.constant 4 : index
    %c0_38 = arith.constant 0 : index
    %c0_39 = arith.constant 0 : index
    %51 = vector.load %arg3[%c4_37, %c0_38, %c0_39] : memref<6x1x128xf32, #tpu.memory_space<vmem>>, vector<1x1x128xf32>
    %52 = vector.shape_cast %51 : vector<1x1x128xf32> to vector<1x128xf32>
    %53 = vector.broadcast %52 : vector<1x128xf32> to vector<128x128xf32>
    %54 = arith.addf %50, %53 : vector<128x128xf32>
    %cst_40 = arith.constant 0.000000e+00 : f32
    %55 = vector.broadcast %cst_40 : f32 to vector<128x128xf32>
    %56 = arith.maximumf %54, %55 : vector<128x128xf32>
    %57 = arith.truncf %56 : vector<128x128xf32> to vector<128x128xbf16>
    %c5 = arith.constant 5 : index
    %c0_41 = arith.constant 0 : index
    %c0_42 = arith.constant 0 : index
    %58 = vector.load %arg2[%c5, %c0_41, %c0_42] : memref<6x128x128xbf16, #tpu.memory_space<vmem>>, vector<1x128x128xbf16>
    %59 = vector.shape_cast %58 : vector<1x128x128xbf16> to vector<128x128xbf16>
    %cst_43 = arith.constant dense<0.000000e+00> : vector<128x128xf32>
    %60 = tpu.matmul %57, %59, %cst_43 {dimension_numbers = #tpu.dot_dimension_numbers<[1], [0], [0], [1], [0, 0, 1, 1], [], []>} : vector<128x128xbf16>, vector<128x128xbf16>, vector<128x128xf32> -> vector<128x128xf32>
    %c5_44 = arith.constant 5 : index
    %c0_45 = arith.constant 0 : index
    %c0_46 = arith.constant 0 : index
    %61 = vector.load %arg3[%c5_44, %c0_45, %c0_46] : memref<6x1x128xf32, #tpu.memory_space<vmem>>, vector<1x1x128xf32>
    %62 = vector.shape_cast %61 : vector<1x1x128xf32> to vector<1x128xf32>
    %63 = vector.broadcast %62 : vector<1x128xf32> to vector<128x128xf32>
    %64 = arith.addf %60, %63 : vector<128x128xf32>
    %cst_47 = arith.constant dense<0xFF800000> : vector<128xf32>
    %65 = vector.multi_reduction <maximumf>, %64, %cst_47 [1] : vector<128x128xf32> to vector<128xf32>
    %66 = vector.shape_cast %65 : vector<128xf32> to vector<128x1xf32>
    %67 = vector.broadcast %66 : vector<128x1xf32> to vector<128x128xf32>
    %68 = arith.subf %64, %67 : vector<128x128xf32>
    %69 = math.exp %68 : vector<128x128xf32>
    %cst_48 = arith.constant dense<0.000000e+00> : vector<128xf32>
    %70 = vector.multi_reduction <add>, %69, %cst_48 [1] : vector<128x128xf32> to vector<128xf32>
    %71 = vector.shape_cast %70 : vector<128xf32> to vector<128x1xf32>
    %72 = math.log %71 : vector<128x1xf32>
    %73 = arith.addf %66, %72 : vector<128x1xf32>
    %74 = vector.broadcast %73 : vector<128x1xf32> to vector<128x128xf32>
    %75 = arith.subf %64, %74 : vector<128x128xf32>
    %c0_49 = arith.constant 0 : index
    %c0_50 = arith.constant 0 : index
    %76 = vector.load %arg4[%c0_49, %c0_50] : memref<128x128xf32, #tpu.memory_space<vmem>>, vector<128x128xf32>
    tpu.vector_store %arg4[%c0_49, %c0_50], %75 {strides = array<i32>} : memref<128x128xf32, #tpu.memory_space<vmem>>, vector<128x128xf32>,
    return
  }
}

</mosaic_0001>

<llo_original>
// kernel: _forward_padded.1
$region0: #{_forward_padded.1}
  #allocation0 [shape = 'u32[]', space=smem, size = 0x4, offset = 0x4, fixed_abs, tag = 'smem constant byte address 0x4 - core index']
  #allocation1 [shape = 'u32[144,128]{1,0:T(1,128)}', space=vmem, size = 0x12000, scoped, tag = 'internal scratch']
  %s0 = inlined_call_operand.hbm [shape: bf16[128,128], index: 0, kind: input, shape index: {}]
  %s1 = inlined_call_operand.hbm [shape: bf16[128,128], index: 1, kind: input, shape index: {}]
  %s2 = inlined_call_operand.hbm [shape: bf16[6,128,128], index: 2, kind: input, shape index: {}]
  %s3 = inlined_call_operand.hbm [shape: f32[6,1,128], index: 3, kind: input, shape index: {}]
  %s4 = inlined_call_operand.hbm [shape: f32[128,128], index: 4, kind: output, shape index: {}]
  %s5 = sld [smem:[#allocation0]]
  $region42: #{_forward_padded.1} parent=0
    _
  %s7 = ssub.s32 1, %s5
  %s8 = scalar_select 0, %s7, %s5
  $region1: #{_forward_padded.1} parent=0
    #allocation2 [shape = 'u8[32768]{0}', space=vmem, size = 0x8000, scoped, tag = 'input window, operand 0, single buffered']
    #allocation3 [shape = 's32[1]{0}', space=sflag, size = 0x4, scoped, tag = 'scoped memory for _forward_padded.1']
    #allocation4 [shape = 's32[1]{0}', space=sflag, size = 0x4, scoped, tag = 'scoped memory for _forward_padded.1']
    #allocation5 [shape = 'u8[32768]{0}', space=vmem, size = 0x8000, scoped, tag = 'input window, operand 1, single buffered']
    #allocation6 [shape = 's32[1]{0}', space=sflag, size = 0x4, scoped, tag = 'scoped memory for _forward_padded.1']
    #allocation7 [shape = 'u8[196608]{0}', space=vmem, size = 0x30000, scoped, tag = 'input window, operand 2, single buffered']
    #allocation8 [shape = 'u8[3072]{0}', space=vmem, size = 0xc00, scoped, tag = 'input window, operand 3, single buffered']
    #allocation9 [shape = 's32[1]{0}', space=sflag, size = 0x4, scoped, tag = 'scoped memory for _forward_padded.1']
    #allocation10 [shape = 'u8[65536]{0}', space=vmem, size = 0x10000, scoped, tag = 'output window, operand 0, single buffered']
    %9 = vsyncpa [#allocation3], 0
    %10 = vsyncpa [#allocation6], 0
    %11 = vsyncpa [#allocation9], 0
    %12 = vsyncpa [#allocation4], 0
    // Predicated region
    $region2: #{_forward_padded.1} parent=1 // pred_check
      _
    $region3: #{_forward_padded.1} parent=1 // pred_check_branch
      %14 = sbr.rel (0) target = $region5
    $region4: #{_forward_padded.1} parent=1 // pred_region
      %s16 = ssub.s32 1024, 1024
      %17 = vsyncadd [#allocation3], %s16
      %s18 = sshll.u32 [#allocation2], 4
      %s19 = int_to_ptr.vmem [resolvable:$true] %s18
      %24 = dma.hbm_to_vmem [thread:$0]  %s0, 1024, %s19, [#allocation3], 64, 64, 4
    $region5: #{_forward_padded.1} parent=1 // pred_fallthru
      _
    // Predicated region
    $region6: #{_forward_padded.1} parent=1 // pred_check
      _
    $region7: #{_forward_padded.1} parent=1 // pred_check_branch
      %26 = sbr.rel (0) target = $region9
    $region8: #{_forward_padded.1} parent=1 // pred_region
      %s28 = ssub.s32 1024, 1024
      %29 = vsyncadd [#allocation6], %s28
      %s30 = sshll.u32 [#allocation5], 4
      %s31 = int_to_ptr.vmem [resolvable:$true] %s30
      %36 = dma.hbm_to_vmem [thread:$0]  %s1, 1024, %s31, [#allocation6], 64, 64, 4
    $region9: #{_forward_padded.1} parent=1 // pred_fallthru
      _
    // Predicated region
    $region10: #{_forward_padded.1} parent=1 // pred_check
      _
    $region11: #{_forward_padded.1} parent=1 // pred_check_branch
      %38 = sbr.rel (0) target = $region13
    $region12: #{_forward_padded.1} parent=1 // pred_region
      %s40 = ssub.s32 6144, 6144
      %41 = vsyncadd [#allocation6], %s40
      %s42 = sshll.u32 [#allocation7], 4
      %s43 = int_to_ptr.vmem [resolvable:$true] %s42
      %48 = dma.hbm_to_vmem [thread:$0]  %s2, 6144, %s43, [#allocation6], 64, 64, 4
    $region13: #{_forward_padded.1} parent=1 // pred_fallthru
      _
    // Predicated region
    $region14: #{_forward_padded.1} parent=1 // pred_check
      _
    $region15: #{_forward_padded.1} parent=1 // pred_check_branch
      %50 = sbr.rel (0) target = $region17
    $region16: #{_forward_padded.1} parent=1 // pred_region
      %s52 = ssub.s32 96, 96
      %53 = vsyncadd [#allocation9], %s52
      %s54 = sshll.u32 [#allocation8], 4
      %s55 = int_to_ptr.vmem [resolvable:$true] %s54
      %60 = dma.hbm_to_vmem [thread:$0]  %s3, 96, %s55, [#allocation9], 16, 16, 1
    $region17: #{_forward_padded.1} parent=1 // pred_fallthru
      _
    // Predicated region
    $region18: #{_forward_padded.1} parent=1 // pred_check
      _
    $region19: #{_forward_padded.1} parent=1 // pred_check_branch
      %62 = sbr.rel (0) target = $region21
    $region20: #{_forward_padded.1} parent=1 // pred_region
      %63 = dma.done [#allocation3], 1024
    $region21: #{_forward_padded.1} parent=1 // pred_fallthru
      _
    // Predicated region
    $region22: #{_forward_padded.1} parent=1 // pred_check
      _
    $region23: #{_forward_padded.1} parent=1 // pred_check_branch
      %65 = sbr.rel (0) target = $region25
    $region24: #{_forward_padded.1} parent=1 // pred_region
      %66 = dma.done [#allocation6], 1024
    $region25: #{_forward_padded.1} parent=1 // pred_fallthru
      _
    // Predicated region
    $region26: #{_forward_padded.1} parent=1 // pred_check
      _
    $region27: #{_forward_padded.1} parent=1 // pred_check_branch
      %68 = sbr.rel (0) target = $region29
    $region28: #{_forward_padded.1} parent=1 // pred_region
      %69 = dma.done [#allocation6], 6144
    $region29: #{_forward_padded.1} parent=1 // pred_fallthru
      _
    // Predicated region
    $region30: #{_forward_padded.1} parent=1 // pred_check
      _
    $region31: #{_forward_padded.1} parent=1 // pred_check_branch
      %71 = sbr.rel (0) target = $region33
    $region32: #{_forward_padded.1} parent=1 // pred_region
      %72 = dma.done [#allocation9], 96
    $region33: #{_forward_padded.1} parent=1 // pred_fallthru
      _
    %v74 = vld [vmem:[#allocation2] sm:$0xf]
    %v75 = vld [vmem:[#allocation2 + $0x4] sm:$0xf]
    %v76 = vld [vmem:[#allocation2 + $0x8] sm:$0xf]
    %v77 = vld [vmem:[#allocation2 + $0xc] sm:$0xf]
    %v78 = vld [vmem:[#allocation2 + $0x10] sm:$0xf]
    %v79 = vld [vmem:[#allocation2 + $0x14] sm:$0xf]
    %v80 = vld [vmem:[#allocation2 + $0x18] sm:$0xf]
    %v81 = vld [vmem:[#allocation2 + $0x1c] sm:$0xf]
    %v82 = vld [vmem:[#allocation2 + $0x20] sm:$0xf]
    %v83 = vld [vmem:[#allocation2 + $0x24] sm:$0xf]
    %v84 = vld [vmem:[#allocation2 + $0x28] sm:$0xf]
    %v85 = vld [vmem:[#allocation2 + $0x2c] sm:$0xf]
    %v86 = vld [vmem:[#allocation2 + $0x30] sm:$0xf]
    %v87 = vld [vmem:[#allocation2 + $0x34] sm:$0xf]
    %v88 = vld [vmem:[#allocation2 + $0x38] sm:$0xf]
    %v89 = vld [vmem:[#allocation2 + $0x3c] sm:$0xf]
    %v90 = vld [vmem:[#allocation5] sm:$0xf]
    %v91 = vld [vmem:[#allocation5 + $0x4] sm:$0xf]
    %v92 = vld [vmem:[#allocation5 + $0x8] sm:$0xf]
    %v93 = vld [vmem:[#allocation5 + $0xc] sm:$0xf]
    %v94 = vld [vmem:[#allocation5 + $0x10] sm:$0xf]
    %v95 = vld [vmem:[#allocation5 + $0x14] sm:$0xf]
    %v96 = vld [vmem:[#allocation5 + $0x18] sm:$0xf]
    %v97 = vld [vmem:[#allocation5 + $0x1c] sm:$0xf]
    %v98 = vld [vmem:[#allocation5 + $0x20] sm:$0xf]
    %v99 = vld [vmem:[#allocation5 + $0x24] sm:$0xf]
    %v100 = vld [vmem:[#allocation5 + $0x28] sm:$0xf]
    %v101 = vld [vmem:[#allocation5 + $0x2c] sm:$0xf]
    %v102 = vld [vmem:[#allocation5 + $0x30] sm:$0xf]
    %v103 = vld [vmem:[#allocation5 + $0x34] sm:$0xf]
    %v104 = vld [vmem:[#allocation5 + $0x38] sm:$0xf]
    %v105 = vld [vmem:[#allocation5 + $0x3c] sm:$0xf]
    %v106 = vld [vmem:[#allocation7] sm:$0xf]
    %v107 = vld [vmem:[#allocation7 + $0x4] sm:$0xf]
    %v108 = vld [vmem:[#allocation7 + $0x8] sm:$0xf]
    %v109 = vld [vmem:[#allocation7 + $0xc] sm:$0xf]
    %v110 = vld [vmem:[#allocation7 + $0x10] sm:$0xf]
    %v111 = vld [vmem:[#allocation7 + $0x14] sm:$0xf]
    %v112 = vld [vmem:[#allocation7 + $0x18] sm:$0xf]
    %v113 = vld [vmem:[#allocation7 + $0x1c] sm:$0xf]
    %v114 = vld [vmem:[#allocation7 + $0x20] sm:$0xf]
    %v115 = vld [vmem:[#allocation7 + $0x24] sm:$0xf]
    %v116 = vld [vmem:[#allocation7 + $0x28] sm:$0xf]
    %v117 = vld [vmem:[#allocation7 + $0x2c] sm:$0xf]
    %v118 = vld [vmem:[#allocation7 + $0x30] sm:$0xf]
    %v119 = vld [vmem:[#allocation7 + $0x34] sm:$0xf]
    %v120 = vld [vmem:[#allocation7 + $0x38] sm:$0xf]
    %v121 = vld [vmem:[#allocation7 + $0x3c] sm:$0xf]
    %v138 = vunpack.c.l.b16 %v90
    %v139 = vunpack.c.l.b16 %v91
    %v140 = vunpack.c.l.b16 %v92
    %v141 = vunpack.c.l.b16 %v93
    %v142 = vunpack.c.l.b16 %v94
    %v143 = vunpack.c.l.b16 %v95
    %v144 = vunpack.c.l.b16 %v96
    %v145 = vunpack.c.l.b16 %v97
    %v146 = vunpack.c.l.b16 %v98
    %v147 = vunpack.c.l.b16 %v99
    %v148 = vunpack.c.l.b16 %v100
    %v149 = vunpack.c.l.b16 %v101
    %v150 = vunpack.c.l.b16 %v102
    %v151 = vunpack.c.l.b16 %v103
    %v152 = vunpack.c.l.b16 %v104
    %v153 = vunpack.c.l.b16 %v105
    %v154 = vpack.c.b16 %v139, %v138
    %v155 = vpack.c.b16 %v141, %v140
    %v156 = vpack.c.b16 %v143, %v142
    %v157 = vpack.c.b16 %v145, %v144
    %v158 = vpack.c.b16 %v147, %v146
    %v159 = vpack.c.b16 %v149, %v148
    %v160 = vpack.c.b16 %v151, %v150
    %v161 = vpack.c.b16 %v153, %v152
    %v186 = vunpack.c.l.b16 %v106
    %v187 = vunpack.c.l.b16 %v107
    %v188 = vunpack.c.l.b16 %v108
    %v189 = vunpack.c.l.b16 %v109
    %v190 = vunpack.c.l.b16 %v110
    %v191 = vunpack.c.l.b16 %v111
    %v192 = vunpack.c.l.b16 %v112
    %v193 = vunpack.c.l.b16 %v113
    %v194 = vunpack.c.l.b16 %v114
    %v195 = vunpack.c.l.b16 %v115
    %v196 = vunpack.c.l.b16 %v116
    %v197 = vunpack.c.l.b16 %v117
    %v198 = vunpack.c.l.b16 %v118
    %v199 = vunpack.c.l.b16 %v119
    %v200 = vunpack.c.l.b16 %v120
    %v201 = vunpack.c.l.b16 %v121
    %v202 = vpack.c.b16 %v187, %v186
    %v203 = vpack.c.b16 %v189, %v188
    %v204 = vpack.c.b16 %v191, %v190
    %v205 = vpack.c.b16 %v193, %v192
    %v206 = vpack.c.b16 %v195, %v194
    %v207 = vpack.c.b16 %v197, %v196
    %v208 = vpack.c.b16 %v199, %v198
    %v209 = vpack.c.b16 %v201, %v200
    %218 = vmatprep.subr.bf16.mxu0 0
    %219 = vmatpush1.bf16.msra.mxu0 %v202
    %220 = vmatprep.subr.bf16.mxu0 0
    %221 = vmatpush1.bf16.msra.mxu0 %v203
    %222 = vmatprep.subr.bf16.mxu0 0
    %223 = vmatpush1.bf16.msra.mxu0 %v204
    %224 = vmatprep.subr.bf16.mxu0 0
    %225 = vmatpush1.bf16.msra.mxu0 %v205
    %226 = vmatprep.subr.bf16.mxu0 0
    %227 = vmatpush1.bf16.msra.mxu0 %v206
    %228 = vmatprep.subr.bf16.mxu0 0
    %229 = vmatpush1.bf16.msra.mxu0 %v207
    %230 = vmatprep.subr.bf16.mxu0 0
    %231 = vmatpush1.bf16.msra.mxu0 %v208
    %232 = vmatprep.subr.bf16.mxu0 0
    %233 = vmatpush1.bf16.msra.mxu0 %v209
    %234 = vmatprep.subr.bf16.mxu0 0
    %235 = vmatpush1.bf16.msra.mxu0 0
    %236 = vmatprep.subr.bf16.mxu0 0
    %237 = vmatpush1.bf16.msra.mxu0 0
    %238 = vmatprep.subr.bf16.mxu0 0
    %239 = vmatpush1.bf16.msra.mxu0 0
    %240 = vmatprep.subr.bf16.mxu0 0
    %241 = vmatpush1.bf16.msra.mxu0 0
    %242 = vmatprep.subr.bf16.mxu0 0
    %243 = vmatpush1.bf16.msra.mxu0 0
    %244 = vmatprep.subr.bf16.mxu0 0
    %245 = vmatpush1.bf16.msra.mxu0 0
    %246 = vmatprep.subr.bf16.mxu0 0
    %247 = vmatpush1.bf16.msra.mxu0 0
    %248 = vmatprep.subr.bf16.mxu0 0
    %249 = vmatpush1.bf16.msra.mxu0 0
    %250 = vmatprep.mubr.bf16.mxu0 0
    %251 = vmatmul.mubr.bf16.gmra.mrb[0].mxu0 %v154
    %v252 = vpop.f32.mrb[0].mxu0
    %v253 = vadd.f32 0.0, %v252
    %v254 = vpop.f32.mrb[0].mxu0
    %v255 = vpop.f32.mrb[0].mxu0
    %v256 = vadd.f32 0.0, %v255
    %v257 = vpop.f32.mrb[0].mxu0
    %258 = vmatprep.mubr.bf16.mxu0 0
    %259 = vmatmul.mubr.bf16.gmra.mrb[0].mxu0 %v155
    %v260 = vpop.f32.mrb[0].mxu0
    %v261 = vadd.f32 0.0, %v260
    %v262 = vpop.f32.mrb[0].mxu0
    %v263 = vpop.f32.mrb[0].mxu0
    %v264 = vadd.f32 0.0, %v263
    %v265 = vpop.f32.mrb[0].mxu0
    %266 = vmatprep.mubr.bf16.mxu0 0
    %267 = vmatmul.mubr.bf16.gmra.mrb[0].mxu0 %v156
    %v268 = vpop.f32.mrb[0].mxu0
    %v269 = vadd.f32 0.0, %v268
    %v270 = vpop.f32.mrb[0].mxu0
    %v271 = vpop.f32.mrb[0].mxu0
    %v272 = vadd.f32 0.0, %v271
    %v273 = vpop.f32.mrb[0].mxu0
    %274 = vmatprep.mubr.bf16.mxu0 0
    %275 = vmatmul.mubr.bf16.gmra.mrb[0].mxu0 %v157
    %v276 = vpop.f32.mrb[0].mxu0
    %v277 = vadd.f32 0.0, %v276
    %v278 = vpop.f32.mrb[0].mxu0
    %v279 = vpop.f32.mrb[0].mxu0
    %v280 = vadd.f32 0.0, %v279
    %v281 = vpop.f32.mrb[0].mxu0
    %282 = vmatprep.mubr.bf16.mxu0 0
    %283 = vmatmul.mubr.bf16.gmra.mrb[0].mxu0 %v158
    %v284 = vpop.f32.mrb[0].mxu0
    %v285 = vadd.f32 0.0, %v284
    %v286 = vpop.f32.mrb[0].mxu0
    %v287 = vpop.f32.mrb[0].mxu0
    %v288 = vadd.f32 0.0, %v287
    %v289 = vpop.f32.mrb[0].mxu0
    %290 = vmatprep.mubr.bf16.mxu0 0
    %291 = vmatmul.mubr.bf16.gmra.mrb[0].mxu0 %v159
    %v292 = vpop.f32.mrb[0].mxu0
    %v293 = vadd.f32 0.0, %v292
    %v294 = vpop.f32.mrb[0].mxu0
    %v295 = vpop.f32.mrb[0].mxu0
    %v296 = vadd.f32 0.0, %v295
    %v297 = vpop.f32.mrb[0].mxu0
    %298 = vmatprep.mubr.bf16.mxu0 0
    %299 = vmatmul.mubr.bf16.gmra.mrb[0].mxu0 %v160
    %v300 = vpop.f32.mrb[0].mxu0
    %v301 = vadd.f32 0.0, %v300
    %v302 = vpop.f32.mrb[0].mxu0
    %v303 = vpop.f32.mrb[0].mxu0
    %v304 = vadd.f32 0.0, %v303
    %v305 = vpop.f32.mrb[0].mxu0
    %306 = vmatprep.mubr.bf16.mxu0 0
    %307 = vmatmul.mubr.bf16.gmra.mrb[0].mxu0 %v161
    %v308 = vpop.f32.mrb[0].mxu0
    %v309 = vadd.f32 0.0, %v308
    %v310 = vpop.f32.mrb[0].mxu0
    %v311 = vpop.f32.mrb[0].mxu0
    %v312 = vadd.f32 0.0, %v311
    %v313 = vpop.f32.mrb[0].mxu0
    %314 = vdwg.mxu0
    %v315 = vpack.c.bf16 %v256, %v253
    %v316 = vpack.c.bf16 %v264, %v261
    %v317 = vpack.c.bf16 %v272, %v269
    %v318 = vpack.c.bf16 %v280, %v277
    %v319 = vpack.c.bf16 %v288, %v285
    %v320 = vpack.c.bf16 %v296, %v293
    %v321 = vpack.c.bf16 %v304, %v301
    %v322 = vpack.c.bf16 %v312, %v309
    %v323 = vld [vmem:[#allocation8] sm:$0x1]
    %v325 = vlaneseq
    %v326 = vshrl.u32 %v325, 7
    %v327 = vsub.s32 0, %v326
    %v328 = vrot.slane %v323, %v327
    %v346 = vunpack.c.l.b16 %v74
    %v347 = vunpack.c.l.b16 %v75
    %v348 = vunpack.c.l.b16 %v76
    %v349 = vunpack.c.l.b16 %v77
    %v350 = vunpack.c.l.b16 %v78
    %v351 = vunpack.c.l.b16 %v79
    %v352 = vunpack.c.l.b16 %v80
    %v353 = vunpack.c.l.b16 %v81
    %v354 = vunpack.c.l.b16 %v82
    %v355 = vunpack.c.l.b16 %v83
    %v356 = vunpack.c.l.b16 %v84
    %v357 = vunpack.c.l.b16 %v85
    %v358 = vunpack.c.l.b16 %v86
    %v359 = vunpack.c.l.b16 %v87
    %v360 = vunpack.c.l.b16 %v88
    %v361 = vunpack.c.l.b16 %v89
    %v362 = vpack.c.b16 %v347, %v346
    %v363 = vpack.c.b16 %v349, %v348
    %v364 = vpack.c.b16 %v351, %v350
    %v365 = vpack.c.b16 %v353, %v352
    %v366 = vpack.c.b16 %v355, %v354
    %v367 = vpack.c.b16 %v357, %v356
    %v368 = vpack.c.b16 %v359, %v358
    %v369 = vpack.c.b16 %v361, %v360
    %378 = vmatprep.subr.bf16.mxu0 0
    %379 = vmatpush1.bf16.msra.mxu0 %v315
    %380 = vmatprep.subr.bf16.mxu0 0
    %381 = vmatpush1.bf16.msra.mxu0 %v316
    %382 = vmatprep.subr.bf16.mxu0 0
    %383 = vmatpush1.bf16.msra.mxu0 %v317
    %384 = vmatprep.subr.bf16.mxu0 0
    %385 = vmatpush1.bf16.msra.mxu0 %v318
    %386 = vmatprep.subr.bf16.mxu0 0
    %387 = vmatpush1.bf16.msra.mxu0 %v319
    %388 = vmatprep.subr.bf16.mxu0 0
    %389 = vmatpush1.bf16.msra.mxu0 %v320
    %390 = vmatprep.subr.bf16.mxu0 0
    %391 = vmatpush1.bf16.msra.mxu0 %v321
    %392 = vmatprep.subr.bf16.mxu0 0
    %393 = vmatpush1.bf16.msra.mxu0 %v322
    %394 = vmatprep.subr.bf16.mxu0 0
    %395 = vmatpush1.bf16.msra.mxu0 0
    %396 = vmatprep.subr.bf16.mxu0 0
    %397 = vmatpush1.bf16.msra.mxu0 0
    %398 = vmatprep.subr.bf16.mxu0 0
    %399 = vmatpush1.bf16.msra.mxu0 0
    %400 = vmatprep.subr.bf16.mxu0 0
    %401 = vmatpush1.bf16.msra.mxu0 0
    %402 = vmatprep.subr.bf16.mxu0 0
    %403 = vmatpush1.bf16.msra.mxu0 0
    %404 = vmatprep.subr.bf16.mxu0 0
    %405 = vmatpush1.bf16.msra.mxu0 0
    %406 = vmatprep.subr.bf16.mxu0 0
    %407 = vmatpush1.bf16.msra.mxu0 0
    %408 = vmatprep.subr.bf16.mxu0 0
    %409 = vmatpush1.bf16.msra.mxu0 0
    %410 = vmatprep.mubr.bf16.mxu0 0
    %411 = vmatmul.mubr.bf16.gmra.mrb[0].mxu0 %v362
    %v412 = vpop.f32.mrb[0].mxu0
    %v413 = vadd.f32 %v328, %v412
    %v414 = vpop.f32.mrb[0].mxu0
    %v415 = vpop.f32.mrb[0].mxu0
    %v416 = vadd.f32 %v328, %v415
    %v417 = vpop.f32.mrb[0].mxu0
    %418 = vmatprep.mubr.bf16.mxu0 0
    %419 = vmatmul.mubr.bf16.gmra.mrb[0].mxu0 %v363
    %v420 = vpop.f32.mrb[0].mxu0
    %v421 = vadd.f32 %v328, %v420
    %v422 = vpop.f32.mrb[0].mxu0
    %v423 = vpop.f32.mrb[0].mxu0
    %v424 = vadd.f32 %v328, %v423
    %v425 = vpop.f32.mrb[0].mxu0
    %426 = vmatprep.mubr.bf16.mxu0 0
    %427 = vmatmul.mubr.bf16.gmra.mrb[0].mxu0 %v364
    %v428 = vpop.f32.mrb[0].mxu0
    %v429 = vadd.f32 %v328, %v428
    %v430 = vpop.f32.mrb[0].mxu0
    %v431 = vpop.f32.mrb[0].mxu0
    %v432 = vadd.f32 %v328, %v431
    %v433 = vpop.f32.mrb[0].mxu0
    %434 = vmatprep.mubr.bf16.mxu0 0
    %435 = vmatmul.mubr.bf16.gmra.mrb[0].mxu0 %v365
    %v436 = vpop.f32.mrb[0].mxu0
    %v437 = vadd.f32 %v328, %v436
    %v438 = vpop.f32.mrb[0].mxu0
    %v439 = vpop.f32.mrb[0].mxu0
    %v440 = vadd.f32 %v328, %v439
    %v441 = vpop.f32.mrb[0].mxu0
    %442 = vmatprep.mubr.bf16.mxu0 0
    %443 = vmatmul.mubr.bf16.gmra.mrb[0].mxu0 %v366
    %v444 = vpop.f32.mrb[0].mxu0
    %v445 = vadd.f32 %v328, %v444
    %v446 = vpop.f32.mrb[0].mxu0
    %v447 = vpop.f32.mrb[0].mxu0
    %v448 = vadd.f32 %v328, %v447
    %v449 = vpop.f32.mrb[0].mxu0
    %450 = vmatprep.mubr.bf16.mxu0 0
    %451 = vmatmul.mubr.bf16.gmra.mrb[0].mxu0 %v367
    %v452 = vpop.f32.mrb[0].mxu0
    %v453 = vadd.f32 %v328, %v452
    %v454 = vpop.f32.mrb[0].mxu0
    %v455 = vpop.f32.mrb[0].mxu0
    %v456 = vadd.f32 %v328, %v455
    %v457 = vpop.f32.mrb[0].mxu0
    %458 = vmatprep.mubr.bf16.mxu0 0
    %459 = vmatmul.mubr.bf16.gmra.mrb[0].mxu0 %v368
    %v460 = vpop.f32.mrb[0].mxu0
    %v461 = vadd.f32 %v328, %v460
    %v462 = vpop.f32.mrb[0].mxu0
    %v463 = vpop.f32.mrb[0].mxu0
    %v464 = vadd.f32 %v328, %v463
    %v465 = vpop.f32.mrb[0].mxu0
    %466 = vmatprep.mubr.bf16.mxu0 0
    %467 = vmatmul.mubr.bf16.gmra.mrb[0].mxu0 %v369
    %v468 = vpop.f32.mrb[0].mxu0
    %v469 = vadd.f32 %v328, %v468
    %v470 = vpop.f32.mrb[0].mxu0
    %v471 = vpop.f32.mrb[0].mxu0
    %v472 = vadd.f32 %v328, %v471
    %v473 = vpop.f32.mrb[0].mxu0
    %474 = vdwg.mxu0
    %v475 = vmax.f32 %v413, 0.0
    %v476 = vmax.f32 %v416, 0.0
    %v477 = vmax.f32 %v421, 0.0
    %v478 = vmax.f32 %v424, 0.0
    %v479 = vmax.f32 %v429, 0.0
    %v480 = vmax.f32 %v432, 0.0
    %v481 = vmax.f32 %v437, 0.0
    %v482 = vmax.f32 %v440, 0.0
    %v483 = vmax.f32 %v445, 0.0
    %v484 = vmax.f32 %v448, 0.0
    %v485 = vmax.f32 %v453, 0.0
    %v486 = vmax.f32 %v456, 0.0
    %v487 = vmax.f32 %v461, 0.0
    %v488 = vmax.f32 %v464, 0.0
    %v489 = vmax.f32 %v469, 0.0
    %v490 = vmax.f32 %v472, 0.0
    %v491 = vpack.c.bf16 %v476, %v475
    %v492 = vpack.c.bf16 %v478, %v477
    %v493 = vpack.c.bf16 %v480, %v479
    %v494 = vpack.c.bf16 %v482, %v481
    %v495 = vpack.c.bf16 %v484, %v483
    %v496 = vpack.c.bf16 %v486, %v485
    %v497 = vpack.c.bf16 %v488, %v487
    %v498 = vpack.c.bf16 %v490, %v489
    %s499 = scalar_lea.vmem [#allocation7], 64
    %v500 = vld [vmem:[%s499] sm:$0xf]
    %v501 = vld [vmem:[%s499 + $0x4] sm:$0xf]
    %v502 = vld [vmem:[%s499 + $0x8] sm:$0xf]
    %v503 = vld [vmem:[%s499 + $0xc] sm:$0xf]
    %v504 = vld [vmem:[%s499 + $0x10] sm:$0xf]
    %v505 = vld [vmem:[%s499 + $0x14] sm:$0xf]
    %v506 = vld [vmem:[%s499 + $0x18] sm:$0xf]
    %v507 = vld [vmem:[%s499 + $0x1c] sm:$0xf]
    %v508 = vld [vmem:[%s499 + $0x20] sm:$0xf]
    %v509 = vld [vmem:[%s499 + $0x24] sm:$0xf]
    %v510 = vld [vmem:[%s499 + $0x28] sm:$0xf]
    %v511 = vld [vmem:[%s499 + $0x2c] sm:$0xf]
    %v512 = vld [vmem:[%s499 + $0x30] sm:$0xf]
    %v513 = vld [vmem:[%s499 + $0x34] sm:$0xf]
    %v514 = vld [vmem:[%s499 + $0x38] sm:$0xf]
    %v515 = vld [vmem:[%s499 + $0x3c] sm:$0xf]
    %v532 = vunpack.c.l.b16 %v500
    %v533 = vunpack.c.l.b16 %v501
    %v534 = vunpack.c.l.b16 %v502
    %v535 = vunpack.c.l.b16 %v503
    %v536 = vunpack.c.l.b16 %v504
    %v537 = vunpack.c.l.b16 %v505
    %v538 = vunpack.c.l.b16 %v506
    %v539 = vunpack.c.l.b16 %v507
    %v540 = vunpack.c.l.b16 %v508
    %v541 = vunpack.c.l.b16 %v509
    %v542 = vunpack.c.l.b16 %v510
    %v543 = vunpack.c.l.b16 %v511
    %v544 = vunpack.c.l.b16 %v512
    %v545 = vunpack.c.l.b16 %v513
    %v546 = vunpack.c.l.b16 %v514
    %v547 = vunpack.c.l.b16 %v515
    %v548 = vpack.c.b16 %v533, %v532
    %v549 = vpack.c.b16 %v535, %v534
    %v550 = vpack.c.b16 %v537, %v536
    %v551 = vpack.c.b16 %v539, %v538
    %v552 = vpack.c.b16 %v541, %v540
    %v553 = vpack.c.b16 %v543, %v542
    %v554 = vpack.c.b16 %v545, %v544
    %v555 = vpack.c.b16 %v547, %v546
    %564 = vmatprep.subr.bf16.mxu0 0
    %565 = vmatpush1.bf16.msra.mxu0 %v548
    %566 = vmatprep.subr.bf16.mxu0 0
    %567 = vmatpush1.bf16.msra.mxu0 %v549
    %568 = vmatprep.subr.bf16.mxu0 0
    %569 = vmatpush1.bf16.msra.mxu0 %v550
    %570 = vmatprep.subr.bf16.mxu0 0
    %571 = vmatpush1.bf16.msra.mxu0 %v551
    %572 = vmatprep.subr.bf16.mxu0 0
    %573 = vmatpush1.bf16.msra.mxu0 %v552
    %574 = vmatprep.subr.bf16.mxu0 0
    %575 = vmatpush1.bf16.msra.mxu0 %v553
    %576 = vmatprep.subr.bf16.mxu0 0
    %577 = vmatpush1.bf16.msra.mxu0 %v554
    %578 = vmatprep.subr.bf16.mxu0 0
    %579 = vmatpush1.bf16.msra.mxu0 %v555
    %580 = vmatprep.subr.bf16.mxu0 0
    %581 = vmatpush1.bf16.msra.mxu0 0
    %582 = vmatprep.subr.bf16.mxu0 0
    %583 = vmatpush1.bf16.msra.mxu0 0
    %584 = vmatprep.subr.bf16.mxu0 0
    %585 = vmatpush1.bf16.msra.mxu0 0
    %586 = vmatprep.subr.bf16.mxu0 0
    %587 = vmatpush1.bf16.msra.mxu0 0
    %588 = vmatprep.subr.bf16.mxu0 0
    %589 = vmatpush1.bf16.msra.mxu0 0
    %590 = vmatprep.subr.bf16.mxu0 0
    %591 = vmatpush1.bf16.msra.mxu0 0
    %592 = vmatprep.subr.bf16.mxu0 0
    %593 = vmatpush1.bf16.msra.mxu0 0
    %594 = vmatprep.subr.bf16.mxu0 0
    %595 = vmatpush1.bf16.msra.mxu0 0
    %596 = vmatprep.mubr.bf16.mxu0 0
    %597 = vmatmul.mubr.bf16.gmra.mrb[0].mxu0 %v491
    %v598 = vpop.f32.mrb[0].mxu0
    %v599 = vadd.f32 0.0, %v598
    %v600 = vpop.f32.mrb[0].mxu0
    %v601 = vpop.f32.mrb[0].mxu0
    %v602 = vadd.f32 0.0, %v601
    %v603 = vpop.f32.mrb[0].mxu0
    %604 = vmatprep.mubr.bf16.mxu0 0
    %605 = vmatmul.mubr.bf16.gmra.mrb[0].mxu0 %v492
    %v606 = vpop.f32.mrb[0].mxu0
    %v607 = vadd.f32 0.0, %v606
    %v608 = vpop.f32.mrb[0].mxu0
    %v609 = vpop.f32.mrb[0].mxu0
    %v610 = vadd.f32 0.0, %v609
    %v611 = vpop.f32.mrb[0].mxu0
    %612 = vmatprep.mubr.bf16.mxu0 0
    %613 = vmatmul.mubr.bf16.gmra.mrb[0].mxu0 %v493
    %v614 = vpop.f32.mrb[0].mxu0
    %v615 = vadd.f32 0.0, %v614
    %v616 = vpop.f32.mrb[0].mxu0
    %v617 = vpop.f32.mrb[0].mxu0
    %v618 = vadd.f32 0.0, %v617
    %v619 = vpop.f32.mrb[0].mxu0
    %620 = vmatprep.mubr.bf16.mxu0 0
    %621 = vmatmul.mubr.bf16.gmra.mrb[0].mxu0 %v494
    %v622 = vpop.f32.mrb[0].mxu0
    %v623 = vadd.f32 0.0, %v622
    %v624 = vpop.f32.mrb[0].mxu0
    %v625 = vpop.f32.mrb[0].mxu0
    %v626 = vadd.f32 0.0, %v625
    %v627 = vpop.f32.mrb[0].mxu0
    %628 = vmatprep.mubr.bf16.mxu0 0
    %629 = vmatmul.mubr.bf16.gmra.mrb[0].mxu0 %v495
    %v630 = vpop.f32.mrb[0].mxu0
    %v631 = vadd.f32 0.0, %v630
    %v632 = vpop.f32.mrb[0].mxu0
    %v633 = vpop.f32.mrb[0].mxu0
    %v634 = vadd.f32 0.0, %v633
    %v635 = vpop.f32.mrb[0].mxu0
    %636 = vmatprep.mubr.bf16.mxu0 0
    %637 = vmatmul.mubr.bf16.gmra.mrb[0].mxu0 %v496
    %v638 = vpop.f32.mrb[0].mxu0
    %v639 = vadd.f32 0.0, %v638
    %v640 = vpop.f32.mrb[0].mxu0
    %v641 = vpop.f32.mrb[0].mxu0
    %v642 = vadd.f32 0.0, %v641
    %v643 = vpop.f32.mrb[0].mxu0
    %644 = vmatprep.mubr.bf16.mxu0 0
    %645 = vmatmul.mubr.bf16.gmra.mrb[0].mxu0 %v497
    %v646 = vpop.f32.mrb[0].mxu0
    %v647 = vadd.f32 0.0, %v646
    %v648 = vpop.f32.mrb[0].mxu0
    %v649 = vpop.f32.mrb[0].mxu0
    %v650 = vadd.f32 0.0, %v649
    %v651 = vpop.f32.mrb[0].mxu0
    %652 = vmatprep.mubr.bf16.mxu0 0
    %653 = vmatmul.mubr.bf16.gmra.mrb[0].mxu0 %v498
    %v654 = vpop.f32.mrb[0].mxu0
    %v655 = vadd.f32 0.0, %v654
    %v656 = vpop.f32.mrb[0].mxu0
    %v657 = vpop.f32.mrb[0].mxu0
    %v658 = vadd.f32 0.0, %v657
    %v659 = vpop.f32.mrb[0].mxu0
    %660 = vdwg.mxu0
    %v661 = vpack.c.bf16 %v602, %v599
    %v662 = vpack.c.bf16 %v610, %v607
    %v663 = vpack.c.bf16 %v618, %v615
    %v664 = vpack.c.bf16 %v626, %v623
    %v665 = vpack.c.bf16 %v634, %v631
    %v666 = vpack.c.bf16 %v642, %v639
    %v667 = vpack.c.bf16 %v650, %v647
    %v668 = vpack.c.bf16 %v658, %v655
    %s669 = scalar_lea.vmem [#allocation8], 1
    %v670 = vld [vmem:[%s669] sm:$0x1]
    %v672 = vlaneseq
    %v673 = vshrl.u32 %v672, 7
    %v674 = vsub.s32 0, %v673
    %v675 = vrot.slane %v670, %v674
    %677 = vmatprep.subr.bf16.mxu0 0
    %678 = vmatpush1.bf16.msra.mxu0 %v661
    %679 = vmatprep.subr.bf16.mxu0 0
    %680 = vmatpush1.bf16.msra.mxu0 %v662
    %681 = vmatprep.subr.bf16.mxu0 0
    %682 = vmatpush1.bf16.msra.mxu0 %v663
    %683 = vmatprep.subr.bf16.mxu0 0
    %684 = vmatpush1.bf16.msra.mxu0 %v664
    %685 = vmatprep.subr.bf16.mxu0 0
    %686 = vmatpush1.bf16.msra.mxu0 %v665
    %687 = vmatprep.subr.bf16.mxu0 0
    %688 = vmatpush1.bf16.msra.mxu0 %v666
    %689 = vmatprep.subr.bf16.mxu0 0
    %690 = vmatpush1.bf16.msra.mxu0 %v667
    %691 = vmatprep.subr.bf16.mxu0 0
    %692 = vmatpush1.bf16.msra.mxu0 %v668
    %693 = vmatprep.subr.bf16.mxu0 0
    %694 = vmatpush1.bf16.msra.mxu0 0
    %695 = vmatprep.subr.bf16.mxu0 0
    %696 = vmatpush1.bf16.msra.mxu0 0
    %697 = vmatprep.subr.bf16.mxu0 0
    %698 = vmatpush1.bf16.msra.mxu0 0
    %699 = vmatprep.subr.bf16.mxu0 0
    %700 = vmatpush1.bf16.msra.mxu0 0
    %701 = vmatprep.subr.bf16.mxu0 0
    %702 = vmatpush1.bf16.msra.mxu0 0
    %703 = vmatprep.subr.bf16.mxu0 0
    %704 = vmatpush1.bf16.msra.mxu0 0
    %705 = vmatprep.subr.bf16.mxu0 0
    %706 = vmatpush1.bf16.msra.mxu0 0
    %707 = vmatprep.subr.bf16.mxu0 0
    %708 = vmatpush1.bf16.msra.mxu0 0
    %709 = vmatprep.mubr.bf16.mxu0 0
    %710 = vmatmul.mubr.bf16.gmra.mrb[0].mxu0 %v362
    %v711 = vpop.f32.mrb[0].mxu0
    %v712 = vadd.f32 %v675, %v711
    %v713 = vpop.f32.mrb[0].mxu0
    %v714 = vpop.f32.mrb[0].mxu0
    %v715 = vadd.f32 %v675, %v714
    %v716 = vpop.f32.mrb[0].mxu0
    %717 = vmatprep.mubr.bf16.mxu0 0
    %718 = vmatmul.mubr.bf16.gmra.mrb[0].mxu0 %v363
    %v719 = vpop.f32.mrb[0].mxu0
    %v720 = vadd.f32 %v675, %v719
    %v721 = vpop.f32.mrb[0].mxu0
    %v722 = vpop.f32.mrb[0].mxu0
    %v723 = vadd.f32 %v675, %v722
    %v724 = vpop.f32.mrb[0].mxu0
    %725 = vmatprep.mubr.bf16.mxu0 0
    %726 = vmatmul.mubr.bf16.gmra.mrb[0].mxu0 %v364
    %v727 = vpop.f32.mrb[0].mxu0
    %v728 = vadd.f32 %v675, %v727
    %v729 = vpop.f32.mrb[0].mxu0
    %v730 = vpop.f32.mrb[0].mxu0
    %v731 = vadd.f32 %v675, %v730
    %v732 = vpop.f32.mrb[0].mxu0
    %733 = vmatprep.mubr.bf16.mxu0 0
    %734 = vmatmul.mubr.bf16.gmra.mrb[0].mxu0 %v365
    %v735 = vpop.f32.mrb[0].mxu0
    %v736 = vadd.f32 %v675, %v735
    %v737 = vpop.f32.mrb[0].mxu0
    %v738 = vpop.f32.mrb[0].mxu0
    %v739 = vadd.f32 %v675, %v738
    %v740 = vpop.f32.mrb[0].mxu0
    %741 = vmatprep.mubr.bf16.mxu0 0
    %742 = vmatmul.mubr.bf16.gmra.mrb[0].mxu0 %v366
    %v743 = vpop.f32.mrb[0].mxu0
    %v744 = vadd.f32 %v675, %v743
    %v745 = vpop.f32.mrb[0].mxu0
    %v746 = vpop.f32.mrb[0].mxu0
    %v747 = vadd.f32 %v675, %v746
    %v748 = vpop.f32.mrb[0].mxu0
    %749 = vmatprep.mubr.bf16.mxu0 0
    %750 = vmatmul.mubr.bf16.gmra.mrb[0].mxu0 %v367
    %v751 = vpop.f32.mrb[0].mxu0
    %v752 = vadd.f32 %v675, %v751
    %v753 = vpop.f32.mrb[0].mxu0
    %v754 = vpop.f32.mrb[0].mxu0
    %v755 = vadd.f32 %v675, %v754
    %v756 = vpop.f32.mrb[0].mxu0
    %757 = vmatprep.mubr.bf16.mxu0 0
    %758 = vmatmul.mubr.bf16.gmra.mrb[0].mxu0 %v368
    %v759 = vpop.f32.mrb[0].mxu0
    %v760 = vadd.f32 %v675, %v759
    %v761 = vpop.f32.mrb[0].mxu0
    %v762 = vpop.f32.mrb[0].mxu0
    %v763 = vadd.f32 %v675, %v762
    %v764 = vpop.f32.mrb[0].mxu0
    %765 = vmatprep.mubr.bf16.mxu0 0
    %766 = vmatmul.mubr.bf16.gmra.mrb[0].mxu0 %v369
    %v767 = vpop.f32.mrb[0].mxu0
    %v768 = vadd.f32 %v675, %v767
    %v769 = vpop.f32.mrb[0].mxu0
    %v770 = vpop.f32.mrb[0].mxu0
    %v771 = vadd.f32 %v675, %v770
    %v772 = vpop.f32.mrb[0].mxu0
    %773 = vdwg.mxu0
    %v774 = vmax.f32 %v712, 0.0
    %v775 = vmax.f32 %v715, 0.0
    %v776 = vmax.f32 %v720, 0.0
    %v777 = vmax.f32 %v723, 0.0
    %v778 = vmax.f32 %v728, 0.0
    %v779 = vmax.f32 %v731, 0.0
    %v780 = vmax.f32 %v736, 0.0
    %v781 = vmax.f32 %v739, 0.0
    %v782 = vmax.f32 %v744, 0.0
    %v783 = vmax.f32 %v747, 0.0
    %v784 = vmax.f32 %v752, 0.0
    %v785 = vmax.f32 %v755, 0.0
    %v786 = vmax.f32 %v760, 0.0
    %v787 = vmax.f32 %v763, 0.0
    %v788 = vmax.f32 %v768, 0.0
    %v789 = vmax.f32 %v771, 0.0
    %v790 = vpack.c.bf16 %v775, %v774
    %v791 = vpack.c.bf16 %v777, %v776
    %v792 = vpack.c.bf16 %v779, %v778
    %v793 = vpack.c.bf16 %v781, %v780
    %v794 = vpack.c.bf16 %v783, %v782
    %v795 = vpack.c.bf16 %v785, %v784
    %v796 = vpack.c.bf16 %v787, %v786
    %v797 = vpack.c.bf16 %v789, %v788
    %s798 = scalar_lea.vmem [#allocation7], 128
    %v799 = vld [vmem:[%s798] sm:$0xf]
    %v800 = vld [vmem:[%s798 + $0x4] sm:$0xf]
    %v801 = vld [vmem:[%s798 + $0x8] sm:$0xf]
    %v802 = vld [vmem:[%s798 + $0xc] sm:$0xf]
    %v803 = vld [vmem:[%s798 + $0x10] sm:$0xf]
    %v804 = vld [vmem:[%s798 + $0x14] sm:$0xf]
    %v805 = vld [vmem:[%s798 + $0x18] sm:$0xf]
    %v806 = vld [vmem:[%s798 + $0x1c] sm:$0xf]
    %v807 = vld [vmem:[%s798 + $0x20] sm:$0xf]
    %v808 = vld [vmem:[%s798 + $0x24] sm:$0xf]
    %v809 = vld [vmem:[%s798 + $0x28] sm:$0xf]
    %v810 = vld [vmem:[%s798 + $0x2c] sm:$0xf]
    %v811 = vld [vmem:[%s798 + $0x30] sm:$0xf]
    %v812 = vld [vmem:[%s798 + $0x34] sm:$0xf]
    %v813 = vld [vmem:[%s798 + $0x38] sm:$0xf]
    %v814 = vld [vmem:[%s798 + $0x3c] sm:$0xf]
    %v831 = vunpack.c.l.b16 %v799
    %v832 = vunpack.c.l.b16 %v800
    %v833 = vunpack.c.l.b16 %v801
    %v834 = vunpack.c.l.b16 %v802
    %v835 = vunpack.c.l.b16 %v803
    %v836 = vunpack.c.l.b16 %v804
    %v837 = vunpack.c.l.b16 %v805
    %v838 = vunpack.c.l.b16 %v806
    %v839 = vunpack.c.l.b16 %v807
    %v840 = vunpack.c.l.b16 %v808
    %v841 = vunpack.c.l.b16 %v809
    %v842 = vunpack.c.l.b16 %v810
    %v843 = vunpack.c.l.b16 %v811
    %v844 = vunpack.c.l.b16 %v812
    %v845 = vunpack.c.l.b16 %v813
    %v846 = vunpack.c.l.b16 %v814
    %v847 = vpack.c.b16 %v832, %v831
    %v848 = vpack.c.b16 %v834, %v833
    %v849 = vpack.c.b16 %v836, %v835
    %v850 = vpack.c.b16 %v838, %v837
    %v851 = vpack.c.b16 %v840, %v839
    %v852 = vpack.c.b16 %v842, %v841
    %v853 = vpack.c.b16 %v844, %v843
    %v854 = vpack.c.b16 %v846, %v845
    %863 = vmatprep.subr.bf16.mxu0 0
    %864 = vmatpush1.bf16.msra.mxu0 %v847
    %865 = vmatprep.subr.bf16.mxu0 0
    %866 = vmatpush1.bf16.msra.mxu0 %v848
    %867 = vmatprep.subr.bf16.mxu0 0
    %868 = vmatpush1.bf16.msra.mxu0 %v849
    %869 = vmatprep.subr.bf16.mxu0 0
    %870 = vmatpush1.bf16.msra.mxu0 %v850
    %871 = vmatprep.subr.bf16.mxu0 0
    %872 = vmatpush1.bf16.msra.mxu0 %v851
    %873 = vmatprep.subr.bf16.mxu0 0
    %874 = vmatpush1.bf16.msra.mxu0 %v852
    %875 = vmatprep.subr.bf16.mxu0 0
    %876 = vmatpush1.bf16.msra.mxu0 %v853
    %877 = vmatprep.subr.bf16.mxu0 0
    %878 = vmatpush1.bf16.msra.mxu0 %v854
    %879 = vmatprep.subr.bf16.mxu0 0
    %880 = vmatpush1.bf16.msra.mxu0 0
    %881 = vmatprep.subr.bf16.mxu0 0
    %882 = vmatpush1.bf16.msra.mxu0 0
    %883 = vmatprep.subr.bf16.mxu0 0
    %884 = vmatpush1.bf16.msra.mxu0 0
    %885 = vmatprep.subr.bf16.mxu0 0
    %886 = vmatpush1.bf16.msra.mxu0 0
    %887 = vmatprep.subr.bf16.mxu0 0
    %888 = vmatpush1.bf16.msra.mxu0 0
    %889 = vmatprep.subr.bf16.mxu0 0
    %890 = vmatpush1.bf16.msra.mxu0 0
    %891 = vmatprep.subr.bf16.mxu0 0
    %892 = vmatpush1.bf16.msra.mxu0 0
    %893 = vmatprep.subr.bf16.mxu0 0
    %894 = vmatpush1.bf16.msra.mxu0 0
    %895 = vmatprep.mubr.bf16.mxu0 0
    %896 = vmatmul.mubr.bf16.gmra.mrb[0].mxu0 %v790
    %v897 = vpop.f32.mrb[0].mxu0
    %v898 = vadd.f32 0.0, %v897
    %v899 = vpop.f32.mrb[0].mxu0
    %v900 = vpop.f32.mrb[0].mxu0
    %v901 = vadd.f32 0.0, %v900
    %v902 = vpop.f32.mrb[0].mxu0
    %903 = vmatprep.mubr.bf16.mxu0 0
    %904 = vmatmul.mubr.bf16.gmra.mrb[0].mxu0 %v791
    %v905 = vpop.f32.mrb[0].mxu0
    %v906 = vadd.f32 0.0, %v905
    %v907 = vpop.f32.mrb[0].mxu0
    %v908 = vpop.f32.mrb[0].mxu0
    %v909 = vadd.f32 0.0, %v908
    %v910 = vpop.f32.mrb[0].mxu0
    %911 = vmatprep.mubr.bf16.mxu0 0
    %912 = vmatmul.mubr.bf16.gmra.mrb[0].mxu0 %v792
    %v913 = vpop.f32.mrb[0].mxu0
    %v914 = vadd.f32 0.0, %v913
    %v915 = vpop.f32.mrb[0].mxu0
    %v916 = vpop.f32.mrb[0].mxu0
    %v917 = vadd.f32 0.0, %v916
    %v918 = vpop.f32.mrb[0].mxu0
    %919 = vmatprep.mubr.bf16.mxu0 0
    %920 = vmatmul.mubr.bf16.gmra.mrb[0].mxu0 %v793
    %v921 = vpop.f32.mrb[0].mxu0
    %v922 = vadd.f32 0.0, %v921
    %v923 = vpop.f32.mrb[0].mxu0
    %v924 = vpop.f32.mrb[0].mxu0
    %v925 = vadd.f32 0.0, %v924
    %v926 = vpop.f32.mrb[0].mxu0
    %927 = vmatprep.mubr.bf16.mxu0 0
    %928 = vmatmul.mubr.bf16.gmra.mrb[0].mxu0 %v794
    %v929 = vpop.f32.mrb[0].mxu0
    %v930 = vadd.f32 0.0, %v929
    %v931 = vpop.f32.mrb[0].mxu0
    %v932 = vpop.f32.mrb[0].mxu0
    %v933 = vadd.f32 0.0, %v932
    %v934 = vpop.f32.mrb[0].mxu0
    %935 = vmatprep.mubr.bf16.mxu0 0
    %936 = vmatmul.mubr.bf16.gmra.mrb[0].mxu0 %v795
    %v937 = vpop.f32.mrb[0].mxu0
    %v938 = vadd.f32 0.0, %v937
    %v939 = vpop.f32.mrb[0].mxu0
    %v940 = vpop.f32.mrb[0].mxu0
    %v941 = vadd.f32 0.0, %v940
    %v942 = vpop.f32.mrb[0].mxu0
    %943 = vmatprep.mubr.bf16.mxu0 0
    %944 = vmatmul.mubr.bf16.gmra.mrb[0].mxu0 %v796
    %v945 = vpop.f32.mrb[0].mxu0
    %v946 = vadd.f32 0.0, %v945
    %v947 = vpop.f32.mrb[0].mxu0
    %v948 = vpop.f32.mrb[0].mxu0
    %v949 = vadd.f32 0.0, %v948
    %v950 = vpop.f32.mrb[0].mxu0
    %951 = vmatprep.mubr.bf16.mxu0 0
    %952 = vmatmul.mubr.bf16.gmra.mrb[0].mxu0 %v797
    %v953 = vpop.f32.mrb[0].mxu0
    %v954 = vadd.f32 0.0, %v953
    %v955 = vpop.f32.mrb[0].mxu0
    %v956 = vpop.f32.mrb[0].mxu0
    %v957 = vadd.f32 0.0, %v956
    %v958 = vpop.f32.mrb[0].mxu0
    %959 = vdwg.mxu0
    %v960 = vpack.c.bf16 %v901, %v898
    %v961 = vpack.c.bf16 %v909, %v906
    %v962 = vpack.c.bf16 %v917, %v914
    %v963 = vpack.c.bf16 %v925, %v922
    %v964 = vpack.c.bf16 %v933, %v930
    %v965 = vpack.c.bf16 %v941, %v938
    %v966 = vpack.c.bf16 %v949, %v946
    %v967 = vpack.c.bf16 %v957, %v954
    %s968 = scalar_lea.vmem [#allocation8], 2
    %v969 = vld [vmem:[%s968] sm:$0x1]
    %v971 = vlaneseq
    %v972 = vshrl.u32 %v971, 7
    %v973 = vsub.s32 0, %v972
    %v974 = vrot.slane %v969, %v973
    %976 = vmatprep.subr.bf16.mxu0 0
    %977 = vmatpush1.bf16.msra.mxu0 %v960
    %978 = vmatprep.subr.bf16.mxu0 0
    %979 = vmatpush1.bf16.msra.mxu0 %v961
    %980 = vmatprep.subr.bf16.mxu0 0
    %981 = vmatpush1.bf16.msra.mxu0 %v962
    %982 = vmatprep.subr.bf16.mxu0 0
    %983 = vmatpush1.bf16.msra.mxu0 %v963
    %984 = vmatprep.subr.bf16.mxu0 0
    %985 = vmatpush1.bf16.msra.mxu0 %v964
    %986 = vmatprep.subr.bf16.mxu0 0
    %987 = vmatpush1.bf16.msra.mxu0 %v965
    %988 = vmatprep.subr.bf16.mxu0 0
    %989 = vmatpush1.bf16.msra.mxu0 %v966
    %990 = vmatprep.subr.bf16.mxu0 0
    %991 = vmatpush1.bf16.msra.mxu0 %v967
    %992 = vmatprep.subr.bf16.mxu0 0
    %993 = vmatpush1.bf16.msra.mxu0 0
    %994 = vmatprep.subr.bf16.mxu0 0
    %995 = vmatpush1.bf16.msra.mxu0 0
    %996 = vmatprep.subr.bf16.mxu0 0
    %997 = vmatpush1.bf16.msra.mxu0 0
    %998 = vmatprep.subr.bf16.mxu0 0
    %999 = vmatpush1.bf16.msra.mxu0 0
    %1000 = vmatprep.subr.bf16.mxu0 0
    %1001 = vmatpush1.bf16.msra.mxu0 0
    %1002 = vmatprep.subr.bf16.mxu0 0
    %1003 = vmatpush1.bf16.msra.mxu0 0
    %1004 = vmatprep.subr.bf16.mxu0 0
    %1005 = vmatpush1.bf16.msra.mxu0 0
    %1006 = vmatprep.subr.bf16.mxu0 0
    %1007 = vmatpush1.bf16.msra.mxu0 0
    %1008 = vmatprep.mubr.bf16.mxu0 0
    %1009 = vmatmul.mubr.bf16.gmra.mrb[0].mxu0 %v362
    %v1010 = vpop.f32.mrb[0].mxu0
    %v1011 = vadd.f32 %v974, %v1010
    %v1012 = vpop.f32.mrb[0].mxu0
    %v1013 = vpop.f32.mrb[0].mxu0
    %v1014 = vadd.f32 %v974, %v1013
    %v1015 = vpop.f32.mrb[0].mxu0
    %1016 = vmatprep.mubr.bf16.mxu0 0
    %1017 = vmatmul.mubr.bf16.gmra.mrb[0].mxu0 %v363
    %v1018 = vpop.f32.mrb[0].mxu0
    %v1019 = vadd.f32 %v974, %v1018
    %v1020 = vpop.f32.mrb[0].mxu0
    %v1021 = vpop.f32.mrb[0].mxu0
    %v1022 = vadd.f32 %v974, %v1021
    %v1023 = vpop.f32.mrb[0].mxu0
    %1024 = vmatprep.mubr.bf16.mxu0 0
    %1025 = vmatmul.mubr.bf16.gmra.mrb[0].mxu0 %v364
    %v1026 = vpop.f32.mrb[0].mxu0
    %v1027 = vadd.f32 %v974, %v1026
    %v1028 = vpop.f32.mrb[0].mxu0
    %v1029 = vpop.f32.mrb[0].mxu0
    %v1030 = vadd.f32 %v974, %v1029
    %v1031 = vpop.f32.mrb[0].mxu0
    %1032 = vmatprep.mubr.bf16.mxu0 0
    %1033 = vmatmul.mubr.bf16.gmra.mrb[0].mxu0 %v365
    %v1034 = vpop.f32.mrb[0].mxu0
    %v1035 = vadd.f32 %v974, %v1034
    %v1036 = vpop.f32.mrb[0].mxu0
    %v1037 = vpop.f32.mrb[0].mxu0
    %v1038 = vadd.f32 %v974, %v1037
    %v1039 = vpop.f32.mrb[0].mxu0
    %1040 = vmatprep.mubr.bf16.mxu0 0
    %1041 = vmatmul.mubr.bf16.gmra.mrb[0].mxu0 %v366
    %v1042 = vpop.f32.mrb[0].mxu0
    %v1043 = vadd.f32 %v974, %v1042
    %v1044 = vpop.f32.mrb[0].mxu0
    %v1045 = vpop.f32.mrb[0].mxu0
    %v1046 = vadd.f32 %v974, %v1045
    %v1047 = vpop.f32.mrb[0].mxu0
    %1048 = vmatprep.mubr.bf16.mxu0 0
    %1049 = vmatmul.mubr.bf16.gmra.mrb[0].mxu0 %v367
    %v1050 = vpop.f32.mrb[0].mxu0
    %v1051 = vadd.f32 %v974, %v1050
    %v1052 = vpop.f32.mrb[0].mxu0
    %v1053 = vpop.f32.mrb[0].mxu0
    %v1054 = vadd.f32 %v974, %v1053
    %v1055 = vpop.f32.mrb[0].mxu0
    %1056 = vmatprep.mubr.bf16.mxu0 0
    %1057 = vmatmul.mubr.bf16.gmra.mrb[0].mxu0 %v368
    %v1058 = vpop.f32.mrb[0].mxu0
    %v1059 = vadd.f32 %v974, %v1058
    %v1060 = vpop.f32.mrb[0].mxu0
    %v1061 = vpop.f32.mrb[0].mxu0
    %v1062 = vadd.f32 %v974, %v1061
    %v1063 = vpop.f32.mrb[0].mxu0
    %1064 = vmatprep.mubr.bf16.mxu0 0
    %1065 = vmatmul.mubr.bf16.gmra.mrb[0].mxu0 %v369
    %v1066 = vpop.f32.mrb[0].mxu0
    %v1067 = vadd.f32 %v974, %v1066
    %v1068 = vpop.f32.mrb[0].mxu0
    %v1069 = vpop.f32.mrb[0].mxu0
    %v1070 = vadd.f32 %v974, %v1069
    %v1071 = vpop.f32.mrb[0].mxu0
    %1072 = vdwg.mxu0
    %v1073 = vmax.f32 %v1011, 0.0
    %v1074 = vmax.f32 %v1014, 0.0
    %v1075 = vmax.f32 %v1019, 0.0
    %v1076 = vmax.f32 %v1022, 0.0
    %v1077 = vmax.f32 %v1027, 0.0
    %v1078 = vmax.f32 %v1030, 0.0
    %v1079 = vmax.f32 %v1035, 0.0
    %v1080 = vmax.f32 %v1038, 0.0
    %v1081 = vmax.f32 %v1043, 0.0
    %v1082 = vmax.f32 %v1046, 0.0
    %v1083 = vmax.f32 %v1051, 0.0
    %v1084 = vmax.f32 %v1054, 0.0
    %v1085 = vmax.f32 %v1059, 0.0
    %v1086 = vmax.f32 %v1062, 0.0
    %v1087 = vmax.f32 %v1067, 0.0
    %v1088 = vmax.f32 %v1070, 0.0
    %v1089 = vpack.c.bf16 %v1074, %v1073
    %v1090 = vpack.c.bf16 %v1076, %v1075
    %v1091 = vpack.c.bf16 %v1078, %v1077
    %v1092 = vpack.c.bf16 %v1080, %v1079
    %v1093 = vpack.c.bf16 %v1082, %v1081
    %v1094 = vpack.c.bf16 %v1084, %v1083
    %v1095 = vpack.c.bf16 %v1086, %v1085
    %v1096 = vpack.c.bf16 %v1088, %v1087
    %s1097 = scalar_lea.vmem [#allocation7], 192
    %v1098 = vld [vmem:[%s1097] sm:$0xf]
    %v1099 = vld [vmem:[%s1097 + $0x4] sm:$0xf]
    %v1100 = vld [vmem:[%s1097 + $0x8] sm:$0xf]
    %v1101 = vld [vmem:[%s1097 + $0xc] sm:$0xf]
    %v1102 = vld [vmem:[%s1097 + $0x10] sm:$0xf]
    %v1103 = vld [vmem:[%s1097 + $0x14] sm:$0xf]
    %v1104 = vld [vmem:[%s1097 + $0x18] sm:$0xf]
    %v1105 = vld [vmem:[%s1097 + $0x1c] sm:$0xf]
    %v1106 = vld [vmem:[%s1097 + $0x20] sm:$0xf]
    %v1107 = vld [vmem:[%s1097 + $0x24] sm:$0xf]
    %v1108 = vld [vmem:[%s1097 + $0x28] sm:$0xf]
    %v1109 = vld [vmem:[%s1097 + $0x2c] sm:$0xf]
    %v1110 = vld [vmem:[%s1097 + $0x30] sm:$0xf]
    %v1111 = vld [vmem:[%s1097 + $0x34] sm:$0xf]
    %v1112 = vld [vmem:[%s1097 + $0x38] sm:$0xf]
    %v1113 = vld [vmem:[%s1097 + $0x3c] sm:$0xf]
    %s1114 = scalar_lea.vmem [#allocation8], 3
    %v1115 = vld [vmem:[%s1114] sm:$0x1]
    %v1117 = vlaneseq
    %v1118 = vshrl.u32 %v1117, 7
    %v1119 = vsub.s32 0, %v1118
    %v1120 = vrot.slane %v1115, %v1119
    %v1138 = vunpack.c.l.b16 %v1098
    %v1139 = vunpack.c.l.b16 %v1099
    %v1140 = vunpack.c.l.b16 %v1100
    %v1141 = vunpack.c.l.b16 %v1101
    %v1142 = vunpack.c.l.b16 %v1102
    %v1143 = vunpack.c.l.b16 %v1103
    %v1144 = vunpack.c.l.b16 %v1104
    %v1145 = vunpack.c.l.b16 %v1105
    %v1146 = vunpack.c.l.b16 %v1106
    %v1147 = vunpack.c.l.b16 %v1107
    %v1148 = vunpack.c.l.b16 %v1108
    %v1149 = vunpack.c.l.b16 %v1109
    %v1150 = vunpack.c.l.b16 %v1110
    %v1151 = vunpack.c.l.b16 %v1111
    %v1152 = vunpack.c.l.b16 %v1112
    %v1153 = vunpack.c.l.b16 %v1113
    %v1154 = vpack.c.b16 %v1139, %v1138
    %v1155 = vpack.c.b16 %v1141, %v1140
    %v1156 = vpack.c.b16 %v1143, %v1142
    %v1157 = vpack.c.b16 %v1145, %v1144
    %v1158 = vpack.c.b16 %v1147, %v1146
    %v1159 = vpack.c.b16 %v1149, %v1148
    %v1160 = vpack.c.b16 %v1151, %v1150
    %v1161 = vpack.c.b16 %v1153, %v1152
    %1170 = vmatprep.subr.bf16.mxu0 0
    %1171 = vmatpush1.bf16.msra.mxu0 %v1154
    %1172 = vmatprep.subr.bf16.mxu0 0
    %1173 = vmatpush1.bf16.msra.mxu0 %v1155
    %1174 = vmatprep.subr.bf16.mxu0 0
    %1175 = vmatpush1.bf16.msra.mxu0 %v1156
    %1176 = vmatprep.subr.bf16.mxu0 0
    %1177 = vmatpush1.bf16.msra.mxu0 %v1157
    %1178 = vmatprep.subr.bf16.mxu0 0
    %1179 = vmatpush1.bf16.msra.mxu0 %v1158
    %1180 = vmatprep.subr.bf16.mxu0 0
    %1181 = vmatpush1.bf16.msra.mxu0 %v1159
    %1182 = vmatprep.subr.bf16.mxu0 0
    %1183 = vmatpush1.bf16.msra.mxu0 %v1160
    %1184 = vmatprep.subr.bf16.mxu0 0
    %1185 = vmatpush1.bf16.msra.mxu0 %v1161
    %1186 = vmatprep.subr.bf16.mxu0 0
    %1187 = vmatpush1.bf16.msra.mxu0 0
    %1188 = vmatprep.subr.bf16.mxu0 0
    %1189 = vmatpush1.bf16.msra.mxu0 0
    %1190 = vmatprep.subr.bf16.mxu0 0
    %1191 = vmatpush1.bf16.msra.mxu0 0
    %1192 = vmatprep.subr.bf16.mxu0 0
    %1193 = vmatpush1.bf16.msra.mxu0 0
    %1194 = vmatprep.subr.bf16.mxu0 0
    %1195 = vmatpush1.bf16.msra.mxu0 0
    %1196 = vmatprep.subr.bf16.mxu0 0
    %1197 = vmatpush1.bf16.msra.mxu0 0
    %1198 = vmatprep.subr.bf16.mxu0 0
    %1199 = vmatpush1.bf16.msra.mxu0 0
    %1200 = vmatprep.subr.bf16.mxu0 0
    %1201 = vmatpush1.bf16.msra.mxu0 0
    %1202 = vmatprep.mubr.bf16.mxu0 0
    %1203 = vmatmul.mubr.bf16.gmra.mrb[0].mxu0 %v1089
    %v1204 = vpop.f32.mrb[0].mxu0
    %v1205 = vadd.f32 %v1120, %v1204
    %v1206 = vpop.f32.mrb[0].mxu0
    %v1207 = vpop.f32.mrb[0].mxu0
    %v1208 = vadd.f32 %v1120, %v1207
    %v1209 = vpop.f32.mrb[0].mxu0
    %1210 = vmatprep.mubr.bf16.mxu0 0
    %1211 = vmatmul.mubr.bf16.gmra.mrb[0].mxu0 %v1090
    %v1212 = vpop.f32.mrb[0].mxu0
    %v1213 = vadd.f32 %v1120, %v1212
    %v1214 = vpop.f32.mrb[0].mxu0
    %v1215 = vpop.f32.mrb[0].mxu0
    %v1216 = vadd.f32 %v1120, %v1215
    %v1217 = vpop.f32.mrb[0].mxu0
    %1218 = vmatprep.mubr.bf16.mxu0 0
    %1219 = vmatmul.mubr.bf16.gmra.mrb[0].mxu0 %v1091
    %v1220 = vpop.f32.mrb[0].mxu0
    %v1221 = vadd.f32 %v1120, %v1220
    %v1222 = vpop.f32.mrb[0].mxu0
    %v1223 = vpop.f32.mrb[0].mxu0
    %v1224 = vadd.f32 %v1120, %v1223
    %v1225 = vpop.f32.mrb[0].mxu0
    %1226 = vmatprep.mubr.bf16.mxu0 0
    %1227 = vmatmul.mubr.bf16.gmra.mrb[0].mxu0 %v1092
    %v1228 = vpop.f32.mrb[0].mxu0
    %v1229 = vadd.f32 %v1120, %v1228
    %v1230 = vpop.f32.mrb[0].mxu0
    %v1231 = vpop.f32.mrb[0].mxu0
    %v1232 = vadd.f32 %v1120, %v1231
    %v1233 = vpop.f32.mrb[0].mxu0
    %1234 = vmatprep.mubr.bf16.mxu0 0
    %1235 = vmatmul.mubr.bf16.gmra.mrb[0].mxu0 %v1093
    %v1236 = vpop.f32.mrb[0].mxu0
    %v1237 = vadd.f32 %v1120, %v1236
    %v1238 = vpop.f32.mrb[0].mxu0
    %v1239 = vpop.f32.mrb[0].mxu0
    %v1240 = vadd.f32 %v1120, %v1239
    %v1241 = vpop.f32.mrb[0].mxu0
    %1242 = vmatprep.mubr.bf16.mxu0 0
    %1243 = vmatmul.mubr.bf16.gmra.mrb[0].mxu0 %v1094
    %v1244 = vpop.f32.mrb[0].mxu0
    %v1245 = vadd.f32 %v1120, %v1244
    %v1246 = vpop.f32.mrb[0].mxu0
    %v1247 = vpop.f32.mrb[0].mxu0
    %v1248 = vadd.f32 %v1120, %v1247
    %v1249 = vpop.f32.mrb[0].mxu0
    %1250 = vmatprep.mubr.bf16.mxu0 0
    %1251 = vmatmul.mubr.bf16.gmra.mrb[0].mxu0 %v1095
    %v1252 = vpop.f32.mrb[0].mxu0
    %v1253 = vadd.f32 %v1120, %v1252
    %v1254 = vpop.f32.mrb[0].mxu0
    %v1255 = vpop.f32.mrb[0].mxu0
    %v1256 = vadd.f32 %v1120, %v1255
    %v1257 = vpop.f32.mrb[0].mxu0
    %1258 = vmatprep.mubr.bf16.mxu0 0
    %1259 = vmatmul.mubr.bf16.gmra.mrb[0].mxu0 %v1096
    %v1260 = vpop.f32.mrb[0].mxu0
    %v1261 = vadd.f32 %v1120, %v1260
    %v1262 = vpop.f32.mrb[0].mxu0
    %v1263 = vpop.f32.mrb[0].mxu0
    %v1264 = vadd.f32 %v1120, %v1263
    %v1265 = vpop.f32.mrb[0].mxu0
    %1266 = vdwg.mxu0
    %v1267 = vmax.f32 %v1205, 0.0
    %v1268 = vmax.f32 %v1208, 0.0
    %v1269 = vmax.f32 %v1213, 0.0
    %v1270 = vmax.f32 %v1216, 0.0
    %v1271 = vmax.f32 %v1221, 0.0
    %v1272 = vmax.f32 %v1224, 0.0
    %v1273 = vmax.f32 %v1229, 0.0
    %v1274 = vmax.f32 %v1232, 0.0
    %v1275 = vmax.f32 %v1237, 0.0
    %v1276 = vmax.f32 %v1240, 0.0
    %v1277 = vmax.f32 %v1245, 0.0
    %v1278 = vmax.f32 %v1248, 0.0
    %v1279 = vmax.f32 %v1253, 0.0
    %v1280 = vmax.f32 %v1256, 0.0
    %v1281 = vmax.f32 %v1261, 0.0
    %v1282 = vmax.f32 %v1264, 0.0
    %v1283 = vpack.c.bf16 %v1268, %v1267
    %v1284 = vpack.c.bf16 %v1270, %v1269
    %v1285 = vpack.c.bf16 %v1272, %v1271
    %v1286 = vpack.c.bf16 %v1274, %v1273
    %v1287 = vpack.c.bf16 %v1276, %v1275
    %v1288 = vpack.c.bf16 %v1278, %v1277
    %v1289 = vpack.c.bf16 %v1280, %v1279
    %v1290 = vpack.c.bf16 %v1282, %v1281
    %s1291 = scalar_lea.vmem [#allocation7], 256
    %v1292 = vld [vmem:[%s1291] sm:$0xf]
    %v1293 = vld [vmem:[%s1291 + $0x4] sm:$0xf]
    %v1294 = vld [vmem:[%s1291 + $0x8] sm:$0xf]
    %v1295 = vld [vmem:[%s1291 + $0xc] sm:$0xf]
    %v1296 = vld [vmem:[%s1291 + $0x10] sm:$0xf]
    %v1297 = vld [vmem:[%s1291 + $0x14] sm:$0xf]
    %v1298 = vld [vmem:[%s1291 + $0x18] sm:$0xf]
    %v1299 = vld [vmem:[%s1291 + $0x1c] sm:$0xf]
    %v1300 = vld [vmem:[%s1291 + $0x20] sm:$0xf]
    %v1301 = vld [vmem:[%s1291 + $0x24] sm:$0xf]
    %v1302 = vld [vmem:[%s1291 + $0x28] sm:$0xf]
    %v1303 = vld [vmem:[%s1291 + $0x2c] sm:$0xf]
    %v1304 = vld [vmem:[%s1291 + $0x30] sm:$0xf]
    %v1305 = vld [vmem:[%s1291 + $0x34] sm:$0xf]
    %v1306 = vld [vmem:[%s1291 + $0x38] sm:$0xf]
    %v1307 = vld [vmem:[%s1291 + $0x3c] sm:$0xf]
    %s1308 = scalar_lea.vmem [#allocation8], 4
    %v1309 = vld [vmem:[%s1308] sm:$0x1]
    %v1311 = vlaneseq
    %v1312 = vshrl.u32 %v1311, 7
    %v1313 = vsub.s32 0, %v1312
    %v1314 = vrot.slane %v1309, %v1313
    %v1332 = vunpack.c.l.b16 %v1292
    %v1333 = vunpack.c.l.b16 %v1293
    %v1334 = vunpack.c.l.b16 %v1294
    %v1335 = vunpack.c.l.b16 %v1295
    %v1336 = vunpack.c.l.b16 %v1296
    %v1337 = vunpack.c.l.b16 %v1297
    %v1338 = vunpack.c.l.b16 %v1298
    %v1339 = vunpack.c.l.b16 %v1299
    %v1340 = vunpack.c.l.b16 %v1300
    %v1341 = vunpack.c.l.b16 %v1301
    %v1342 = vunpack.c.l.b16 %v1302
    %v1343 = vunpack.c.l.b16 %v1303
    %v1344 = vunpack.c.l.b16 %v1304
    %v1345 = vunpack.c.l.b16 %v1305
    %v1346 = vunpack.c.l.b16 %v1306
    %v1347 = vunpack.c.l.b16 %v1307
    %v1348 = vpack.c.b16 %v1333, %v1332
    %v1349 = vpack.c.b16 %v1335, %v1334
    %v1350 = vpack.c.b16 %v1337, %v1336
    %v1351 = vpack.c.b16 %v1339, %v1338
    %v1352 = vpack.c.b16 %v1341, %v1340
    %v1353 = vpack.c.b16 %v1343, %v1342
    %v1354 = vpack.c.b16 %v1345, %v1344
    %v1355 = vpack.c.b16 %v1347, %v1346
    %1364 = vmatprep.subr.bf16.mxu0 0
    %1365 = vmatpush1.bf16.msra.mxu0 %v1348
    %1366 = vmatprep.subr.bf16.mxu0 0
    %1367 = vmatpush1.bf16.msra.mxu0 %v1349
    %1368 = vmatprep.subr.bf16.mxu0 0
    %1369 = vmatpush1.bf16.msra.mxu0 %v1350
    %1370 = vmatprep.subr.bf16.mxu0 0
    %1371 = vmatpush1.bf16.msra.mxu0 %v1351
    %1372 = vmatprep.subr.bf16.mxu0 0
    %1373 = vmatpush1.bf16.msra.mxu0 %v1352
    %1374 = vmatprep.subr.bf16.mxu0 0
    %1375 = vmatpush1.bf16.msra.mxu0 %v1353
    %1376 = vmatprep.subr.bf16.mxu0 0
    %1377 = vmatpush1.bf16.msra.mxu0 %v1354
    %1378 = vmatprep.subr.bf16.mxu0 0
    %1379 = vmatpush1.bf16.msra.mxu0 %v1355
    %1380 = vmatprep.subr.bf16.mxu0 0
    %1381 = vmatpush1.bf16.msra.mxu0 0
    %1382 = vmatprep.subr.bf16.mxu0 0
    %1383 = vmatpush1.bf16.msra.mxu0 0
    %1384 = vmatprep.subr.bf16.mxu0 0
    %1385 = vmatpush1.bf16.msra.mxu0 0
    %1386 = vmatprep.subr.bf16.mxu0 0
    %1387 = vmatpush1.bf16.msra.mxu0 0
    %1388 = vmatprep.subr.bf16.mxu0 0
    %1389 = vmatpush1.bf16.msra.mxu0 0
    %1390 = vmatprep.subr.bf16.mxu0 0
    %1391 = vmatpush1.bf16.msra.mxu0 0
    %1392 = vmatprep.subr.bf16.mxu0 0
    %1393 = vmatpush1.bf16.msra.mxu0 0
    %1394 = vmatprep.subr.bf16.mxu0 0
    %1395 = vmatpush1.bf16.msra.mxu0 0
    %1396 = vmatprep.mubr.bf16.mxu0 0
    %1397 = vmatmul.mubr.bf16.gmra.mrb[0].mxu0 %v1283
    %v1398 = vpop.f32.mrb[0].mxu0
    %v1399 = vadd.f32 %v1314, %v1398
    %v1400 = vpop.f32.mrb[0].mxu0
    %v1401 = vpop.f32.mrb[0].mxu0
    %v1402 = vadd.f32 %v1314, %v1401
    %v1403 = vpop.f32.mrb[0].mxu0
    %1404 = vmatprep.mubr.bf16.mxu0 0
    %1405 = vmatmul.mubr.bf16.gmra.mrb[0].mxu0 %v1284
    %v1406 = vpop.f32.mrb[0].mxu0
    %v1407 = vadd.f32 %v1314, %v1406
    %v1408 = vpop.f32.mrb[0].mxu0
    %v1409 = vpop.f32.mrb[0].mxu0
    %v1410 = vadd.f32 %v1314, %v1409
    %v1411 = vpop.f32.mrb[0].mxu0
    %1412 = vmatprep.mubr.bf16.mxu0 0
    %1413 = vmatmul.mubr.bf16.gmra.mrb[0].mxu0 %v1285
    %v1414 = vpop.f32.mrb[0].mxu0
    %v1415 = vadd.f32 %v1314, %v1414
    %v1416 = vpop.f32.mrb[0].mxu0
    %v1417 = vpop.f32.mrb[0].mxu0
    %v1418 = vadd.f32 %v1314, %v1417
    %v1419 = vpop.f32.mrb[0].mxu0
    %1420 = vmatprep.mubr.bf16.mxu0 0
    %1421 = vmatmul.mubr.bf16.gmra.mrb[0].mxu0 %v1286
    %v1422 = vpop.f32.mrb[0].mxu0
    %v1423 = vadd.f32 %v1314, %v1422
    %v1424 = vpop.f32.mrb[0].mxu0
    %v1425 = vpop.f32.mrb[0].mxu0
    %v1426 = vadd.f32 %v1314, %v1425
    %v1427 = vpop.f32.mrb[0].mxu0
    %1428 = vmatprep.mubr.bf16.mxu0 0
    %1429 = vmatmul.mubr.bf16.gmra.mrb[0].mxu0 %v1287
    %v1430 = vpop.f32.mrb[0].mxu0
    %v1431 = vadd.f32 %v1314, %v1430
    %v1432 = vpop.f32.mrb[0].mxu0
    %v1433 = vpop.f32.mrb[0].mxu0
    %v1434 = vadd.f32 %v1314, %v1433
    %v1435 = vpop.f32.mrb[0].mxu0
    %1436 = vmatprep.mubr.bf16.mxu0 0
    %1437 = vmatmul.mubr.bf16.gmra.mrb[0].mxu0 %v1288
    %v1438 = vpop.f32.mrb[0].mxu0
    %v1439 = vadd.f32 %v1314, %v1438
    %v1440 = vpop.f32.mrb[0].mxu0
    %v1441 = vpop.f32.mrb[0].mxu0
    %v1442 = vadd.f32 %v1314, %v1441
    %v1443 = vpop.f32.mrb[0].mxu0
    %1444 = vmatprep.mubr.bf16.mxu0 0
    %1445 = vmatmul.mubr.bf16.gmra.mrb[0].mxu0 %v1289
    %v1446 = vpop.f32.mrb[0].mxu0
    %v1447 = vadd.f32 %v1314, %v1446
    %v1448 = vpop.f32.mrb[0].mxu0
    %v1449 = vpop.f32.mrb[0].mxu0
    %v1450 = vadd.f32 %v1314, %v1449
    %v1451 = vpop.f32.mrb[0].mxu0
    %1452 = vmatprep.mubr.bf16.mxu0 0
    %1453 = vmatmul.mubr.bf16.gmra.mrb[0].mxu0 %v1290
    %v1454 = vpop.f32.mrb[0].mxu0
    %v1455 = vadd.f32 %v1314, %v1454
    %v1456 = vpop.f32.mrb[0].mxu0
    %v1457 = vpop.f32.mrb[0].mxu0
    %v1458 = vadd.f32 %v1314, %v1457
    %v1459 = vpop.f32.mrb[0].mxu0
    %1460 = vdwg.mxu0
    %v1461 = vmax.f32 %v1399, 0.0
    %v1462 = vmax.f32 %v1402, 0.0
    %v1463 = vmax.f32 %v1407, 0.0
    %v1464 = vmax.f32 %v1410, 0.0
    %v1465 = vmax.f32 %v1415, 0.0
    %v1466 = vmax.f32 %v1418, 0.0
    %v1467 = vmax.f32 %v1423, 0.0
    %v1468 = vmax.f32 %v1426, 0.0
    %v1469 = vmax.f32 %v1431, 0.0
    %v1470 = vmax.f32 %v1434, 0.0
    %v1471 = vmax.f32 %v1439, 0.0
    %v1472 = vmax.f32 %v1442, 0.0
    %v1473 = vmax.f32 %v1447, 0.0
    %v1474 = vmax.f32 %v1450, 0.0
    %v1475 = vmax.f32 %v1455, 0.0
    %v1476 = vmax.f32 %v1458, 0.0
    %v1477 = vpack.c.bf16 %v1462, %v1461
    %v1478 = vpack.c.bf16 %v1464, %v1463
    %v1479 = vpack.c.bf16 %v1466, %v1465
    %v1480 = vpack.c.bf16 %v1468, %v1467
    %v1481 = vpack.c.bf16 %v1470, %v1469
    %v1482 = vpack.c.bf16 %v1472, %v1471
    %v1483 = vpack.c.bf16 %v1474, %v1473
    %v1484 = vpack.c.bf16 %v1476, %v1475
    %s1485 = scalar_lea.vmem [#allocation7], 320
    %v1486 = vld [vmem:[%s1485] sm:$0xf]
    %v1487 = vld [vmem:[%s1485 + $0x4] sm:$0xf]
    %v1488 = vld [vmem:[%s1485 + $0x8] sm:$0xf]
    %v1489 = vld [vmem:[%s1485 + $0xc] sm:$0xf]
    %v1490 = vld [vmem:[%s1485 + $0x10] sm:$0xf]
    %v1491 = vld [vmem:[%s1485 + $0x14] sm:$0xf]
    %v1492 = vld [vmem:[%s1485 + $0x18] sm:$0xf]
    %v1493 = vld [vmem:[%s1485 + $0x1c] sm:$0xf]
    %v1494 = vld [vmem:[%s1485 + $0x20] sm:$0xf]
    %v1495 = vld [vmem:[%s1485 + $0x24] sm:$0xf]
    %v1496 = vld [vmem:[%s1485 + $0x28] sm:$0xf]
    %v1497 = vld [vmem:[%s1485 + $0x2c] sm:$0xf]
    %v1498 = vld [vmem:[%s1485 + $0x30] sm:$0xf]
    %v1499 = vld [vmem:[%s1485 + $0x34] sm:$0xf]
    %v1500 = vld [vmem:[%s1485 + $0x38] sm:$0xf]
    %v1501 = vld [vmem:[%s1485 + $0x3c] sm:$0xf]
    %s1502 = scalar_lea.vmem [#allocation8], 5
    %v1503 = vld [vmem:[%s1502] sm:$0x1]
    %v1505 = vlaneseq
    %v1506 = vshrl.u32 %v1505, 7
    %v1507 = vsub.s32 0, %v1506
    %v1508 = vrot.slane %v1503, %v1507
    %v1526 = vunpack.c.l.b16 %v1486
    %v1527 = vunpack.c.l.b16 %v1487
    %v1528 = vunpack.c.l.b16 %v1488
    %v1529 = vunpack.c.l.b16 %v1489
    %v1530 = vunpack.c.l.b16 %v1490
    %v1531 = vunpack.c.l.b16 %v1491
    %v1532 = vunpack.c.l.b16 %v1492
    %v1533 = vunpack.c.l.b16 %v1493
    %v1534 = vunpack.c.l.b16 %v1494
    %v1535 = vunpack.c.l.b16 %v1495
    %v1536 = vunpack.c.l.b16 %v1496
    %v1537 = vunpack.c.l.b16 %v1497
    %v1538 = vunpack.c.l.b16 %v1498
    %v1539 = vunpack.c.l.b16 %v1499
    %v1540 = vunpack.c.l.b16 %v1500
    %v1541 = vunpack.c.l.b16 %v1501
    %v1542 = vpack.c.b16 %v1527, %v1526
    %v1543 = vpack.c.b16 %v1529, %v1528
    %v1544 = vpack.c.b16 %v1531, %v1530
    %v1545 = vpack.c.b16 %v1533, %v1532
    %v1546 = vpack.c.b16 %v1535, %v1534
    %v1547 = vpack.c.b16 %v1537, %v1536
    %v1548 = vpack.c.b16 %v1539, %v1538
    %v1549 = vpack.c.b16 %v1541, %v1540
    %1558 = vmatprep.subr.bf16.mxu0 0
    %1559 = vmatpush1.bf16.msra.mxu0 %v1542
    %1560 = vmatprep.subr.bf16.mxu0 0
    %1561 = vmatpush1.bf16.msra.mxu0 %v1543
    %1562 = vmatprep.subr.bf16.mxu0 0
    %1563 = vmatpush1.bf16.msra.mxu0 %v1544
    %1564 = vmatprep.subr.bf16.mxu0 0
    %1565 = vmatpush1.bf16.msra.mxu0 %v1545
    %1566 = vmatprep.subr.bf16.mxu0 0
    %1567 = vmatpush1.bf16.msra.mxu0 %v1546
    %1568 = vmatprep.subr.bf16.mxu0 0
    %1569 = vmatpush1.bf16.msra.mxu0 %v1547
    %1570 = vmatprep.subr.bf16.mxu0 0
    %1571 = vmatpush1.bf16.msra.mxu0 %v1548
    %1572 = vmatprep.subr.bf16.mxu0 0
    %1573 = vmatpush1.bf16.msra.mxu0 %v1549
    %1574 = vmatprep.subr.bf16.mxu0 0
    %1575 = vmatpush1.bf16.msra.mxu0 0
    %1576 = vmatprep.subr.bf16.mxu0 0
    %1577 = vmatpush1.bf16.msra.mxu0 0
    %1578 = vmatprep.subr.bf16.mxu0 0
    %1579 = vmatpush1.bf16.msra.mxu0 0
    %1580 = vmatprep.subr.bf16.mxu0 0
    %1581 = vmatpush1.bf16.msra.mxu0 0
    %1582 = vmatprep.subr.bf16.mxu0 0
    %1583 = vmatpush1.bf16.msra.mxu0 0
    %1584 = vmatprep.subr.bf16.mxu0 0
    %1585 = vmatpush1.bf16.msra.mxu0 0
    %1586 = vmatprep.subr.bf16.mxu0 0
    %1587 = vmatpush1.bf16.msra.mxu0 0
    %1588 = vmatprep.subr.bf16.mxu0 0
    %1589 = vmatpush1.bf16.msra.mxu0 0
    %1590 = vmatprep.mubr.bf16.mxu0 0
    %1591 = vmatmul.mubr.bf16.gmra.mrb[0].mxu0 %v1477
    %v1592 = vpop.f32.mrb[0].mxu0
    %v1593 = vadd.f32 %v1508, %v1592
    %v1594 = vpop.f32.mrb[0].mxu0
    %v1595 = vpop.f32.mrb[0].mxu0
    %v1596 = vadd.f32 %v1508, %v1595
    %v1597 = vpop.f32.mrb[0].mxu0
    %1598 = vmatprep.mubr.bf16.mxu0 0
    %1599 = vmatmul.mubr.bf16.gmra.mrb[0].mxu0 %v1478
    %v1600 = vpop.f32.mrb[0].mxu0
    %v1601 = vadd.f32 %v1508, %v1600
    %v1602 = vpop.f32.mrb[0].mxu0
    %v1603 = vpop.f32.mrb[0].mxu0
    %v1604 = vadd.f32 %v1508, %v1603
    %v1605 = vpop.f32.mrb[0].mxu0
    %1606 = vmatprep.mubr.bf16.mxu0 0
    %1607 = vmatmul.mubr.bf16.gmra.mrb[0].mxu0 %v1479
    %v1608 = vpop.f32.mrb[0].mxu0
    %v1609 = vadd.f32 %v1508, %v1608
    %v1610 = vpop.f32.mrb[0].mxu0
    %v1611 = vpop.f32.mrb[0].mxu0
    %v1612 = vadd.f32 %v1508, %v1611
    %v1613 = vpop.f32.mrb[0].mxu0
    %1614 = vmatprep.mubr.bf16.mxu0 0
    %1615 = vmatmul.mubr.bf16.gmra.mrb[0].mxu0 %v1480
    %v1616 = vpop.f32.mrb[0].mxu0
    %v1617 = vadd.f32 %v1508, %v1616
    %v1618 = vpop.f32.mrb[0].mxu0
    %v1619 = vpop.f32.mrb[0].mxu0
    %v1620 = vadd.f32 %v1508, %v1619
    %v1621 = vpop.f32.mrb[0].mxu0
    %1622 = vmatprep.mubr.bf16.mxu0 0
    %1623 = vmatmul.mubr.bf16.gmra.mrb[0].mxu0 %v1481
    %v1624 = vpop.f32.mrb[0].mxu0
    %v1625 = vadd.f32 %v1508, %v1624
    %v1626 = vpop.f32.mrb[0].mxu0
    %v1627 = vpop.f32.mrb[0].mxu0
    %v1628 = vadd.f32 %v1508, %v1627
    %v1629 = vpop.f32.mrb[0].mxu0
    %1630 = vmatprep.mubr.bf16.mxu0 0
    %1631 = vmatmul.mubr.bf16.gmra.mrb[0].mxu0 %v1482
    %v1632 = vpop.f32.mrb[0].mxu0
    %v1633 = vadd.f32 %v1508, %v1632
    %v1634 = vpop.f32.mrb[0].mxu0
    %v1635 = vpop.f32.mrb[0].mxu0
    %v1636 = vadd.f32 %v1508, %v1635
    %v1637 = vpop.f32.mrb[0].mxu0
    %1638 = vmatprep.mubr.bf16.mxu0 0
    %1639 = vmatmul.mubr.bf16.gmra.mrb[0].mxu0 %v1483
    %v1640 = vpop.f32.mrb[0].mxu0
    %v1641 = vadd.f32 %v1508, %v1640
    %v1642 = vpop.f32.mrb[0].mxu0
    %v1643 = vpop.f32.mrb[0].mxu0
    %v1644 = vadd.f32 %v1508, %v1643
    %v1645 = vpop.f32.mrb[0].mxu0
    %1646 = vmatprep.mubr.bf16.mxu0 0
    %1647 = vmatmul.mubr.bf16.gmra.mrb[0].mxu0 %v1484
    %v1648 = vpop.f32.mrb[0].mxu0
    %v1649 = vadd.f32 %v1508, %v1648
    %v1650 = vpop.f32.mrb[0].mxu0
    %v1651 = vpop.f32.mrb[0].mxu0
    %v1652 = vadd.f32 %v1508, %v1651
    %v1653 = vpop.f32.mrb[0].mxu0
    %1654 = vdwg.mxu0
    %1655 = vmax.xlane.f32.xlu0 %v1593
    %v1656 = vpop.xlane.xlu0 %1655
    %1657 = vmax.xlane.f32.xlu0 %v1596
    %v1658 = vpop.xlane.xlu0 %1657
    %1659 = vmax.xlane.f32.xlu0 %v1601
    %v1660 = vpop.xlane.xlu0 %1659
    %1661 = vmax.xlane.f32.xlu0 %v1604
    %v1662 = vpop.xlane.xlu0 %1661
    %1663 = vmax.xlane.f32.xlu0 %v1609
    %v1664 = vpop.xlane.xlu0 %1663
    %1665 = vmax.xlane.f32.xlu0 %v1612
    %v1666 = vpop.xlane.xlu0 %1665
    %1667 = vmax.xlane.f32.xlu0 %v1617
    %v1668 = vpop.xlane.xlu0 %1667
    %1669 = vmax.xlane.f32.xlu0 %v1620
    %v1670 = vpop.xlane.xlu0 %1669
    %1671 = vmax.xlane.f32.xlu0 %v1625
    %v1672 = vpop.xlane.xlu0 %1671
    %1673 = vmax.xlane.f32.xlu0 %v1628
    %v1674 = vpop.xlane.xlu0 %1673
    %1675 = vmax.xlane.f32.xlu0 %v1633
    %v1676 = vpop.xlane.xlu0 %1675
    %1677 = vmax.xlane.f32.xlu0 %v1636
    %v1678 = vpop.xlane.xlu0 %1677
    %1679 = vmax.xlane.f32.xlu0 %v1641
    %v1680 = vpop.xlane.xlu0 %1679
    %1681 = vmax.xlane.f32.xlu0 %v1644
    %v1682 = vpop.xlane.xlu0 %1681
    %1683 = vmax.xlane.f32.xlu0 %v1649
    %v1684 = vpop.xlane.xlu0 %1683
    %1685 = vmax.xlane.f32.xlu0 %v1652
    %v1686 = vpop.xlane.xlu0 %1685
    %v1687 = vsub.f32 %v1593, %v1656
    %v1688 = vsub.f32 %v1596, %v1658
    %v1689 = vsub.f32 %v1601, %v1660
    %v1690 = vsub.f32 %v1604, %v1662
    %v1691 = vsub.f32 %v1609, %v1664
    %v1692 = vsub.f32 %v1612, %v1666
    %v1693 = vsub.f32 %v1617, %v1668
    %v1694 = vsub.f32 %v1620, %v1670
    %v1695 = vsub.f32 %v1625, %v1672
    %v1696 = vsub.f32 %v1628, %v1674
    %v1697 = vsub.f32 %v1633, %v1676
    %v1698 = vsub.f32 %v1636, %v1678
    %v1699 = vsub.f32 %v1641, %v1680
    %v1700 = vsub.f32 %v1644, %v1682
    %v1701 = vsub.f32 %v1649, %v1684
    %v1702 = vsub.f32 %v1652, %v1686
    %v1703 = vmul.f32 %v1687, 1.442695
    %v1704 = vpow.pop %v1703
    %v1705 = vmul.f32 %v1688, 1.442695
    %v1706 = vpow.pop %v1705
    %v1707 = vmul.f32 %v1689, 1.442695
    %v1708 = vpow.pop %v1707
    %v1709 = vmul.f32 %v1690, 1.442695
    %v1710 = vpow.pop %v1709
    %v1711 = vmul.f32 %v1691, 1.442695
    %v1712 = vpow.pop %v1711
    %v1713 = vmul.f32 %v1692, 1.442695
    %v1714 = vpow.pop %v1713
    %v1715 = vmul.f32 %v1693, 1.442695
    %v1716 = vpow.pop %v1715
    %v1717 = vmul.f32 %v1694, 1.442695
    %v1718 = vpow.pop %v1717
    %v1719 = vmul.f32 %v1695, 1.442695
    %v1720 = vpow.pop %v1719
    %v1721 = vmul.f32 %v1696, 1.442695
    %v1722 = vpow.pop %v1721
    %v1723 = vmul.f32 %v1697, 1.442695
    %v1724 = vpow.pop %v1723
    %v1725 = vmul.f32 %v1698, 1.442695
    %v1726 = vpow.pop %v1725
    %v1727 = vmul.f32 %v1699, 1.442695
    %v1728 = vpow.pop %v1727
    %v1729 = vmul.f32 %v1700, 1.442695
    %v1730 = vpow.pop %v1729
    %v1731 = vmul.f32 %v1701, 1.442695
    %v1732 = vpow.pop %v1731
    %v1733 = vmul.f32 %v1702, 1.442695
    %v1734 = vpow.pop %v1733
    %1735 = vadd.xlane.f32.xlu0 %v1704
    %v1736 = vpop.xlane.xlu0 %1735
    %1737 = vadd.xlane.f32.xlu0 %v1706
    %v1738 = vpop.xlane.xlu0 %1737
    %1739 = vadd.xlane.f32.xlu0 %v1708
    %v1740 = vpop.xlane.xlu0 %1739
    %1741 = vadd.xlane.f32.xlu0 %v1710
    %v1742 = vpop.xlane.xlu0 %1741
    %1743 = vadd.xlane.f32.xlu0 %v1712
    %v1744 = vpop.xlane.xlu0 %1743
    %1745 = vadd.xlane.f32.xlu0 %v1714
    %v1746 = vpop.xlane.xlu0 %1745
    %1747 = vadd.xlane.f32.xlu0 %v1716
    %v1748 = vpop.xlane.xlu0 %1747
    %1749 = vadd.xlane.f32.xlu0 %v1718
    %v1750 = vpop.xlane.xlu0 %1749
    %1751 = vadd.xlane.f32.xlu0 %v1720
    %v1752 = vpop.xlane.xlu0 %1751
    %1753 = vadd.xlane.f32.xlu0 %v1722
    %v1754 = vpop.xlane.xlu0 %1753
    %1755 = vadd.xlane.f32.xlu0 %v1724
    %v1756 = vpop.xlane.xlu0 %1755
    %1757 = vadd.xlane.f32.xlu0 %v1726
    %v1758 = vpop.xlane.xlu0 %1757
    %1759 = vadd.xlane.f32.xlu0 %v1728
    %v1760 = vpop.xlane.xlu0 %1759
    %1761 = vadd.xlane.f32.xlu0 %v1730
    %v1762 = vpop.xlane.xlu0 %1761
    %1763 = vadd.xlane.f32.xlu0 %v1732
    %v1764 = vpop.xlane.xlu0 %1763
    %1765 = vadd.xlane.f32.xlu0 %v1734
    %v1766 = vpop.xlane.xlu0 %1765
    %v1767 = vlog2.pop %v1736
    %v1768 = vmul.f32 %v1767, 0.6931472
    %v1769 = vlog2.pop %v1738
    %v1770 = vmul.f32 %v1769, 0.6931472
    %v1771 = vlog2.pop %v1740
    %v1772 = vmul.f32 %v1771, 0.6931472
    %v1773 = vlog2.pop %v1742
    %v1774 = vmul.f32 %v1773, 0.6931472
    %v1775 = vlog2.pop %v1744
    %v1776 = vmul.f32 %v1775, 0.6931472
    %v1777 = vlog2.pop %v1746
    %v1778 = vmul.f32 %v1777, 0.6931472
    %v1779 = vlog2.pop %v1748
    %v1780 = vmul.f32 %v1779, 0.6931472
    %v1781 = vlog2.pop %v1750
    %v1782 = vmul.f32 %v1781, 0.6931472
    %v1783 = vlog2.pop %v1752
    %v1784 = vmul.f32 %v1783, 0.6931472
    %v1785 = vlog2.pop %v1754
    %v1786 = vmul.f32 %v1785, 0.6931472
    %v1787 = vlog2.pop %v1756
    %v1788 = vmul.f32 %v1787, 0.6931472
    %v1789 = vlog2.pop %v1758
    %v1790 = vmul.f32 %v1789, 0.6931472
    %v1791 = vlog2.pop %v1760
    %v1792 = vmul.f32 %v1791, 0.6931472
    %v1793 = vlog2.pop %v1762
    %v1794 = vmul.f32 %v1793, 0.6931472
    %v1795 = vlog2.pop %v1764
    %v1796 = vmul.f32 %v1795, 0.6931472
    %v1797 = vlog2.pop %v1766
    %v1798 = vmul.f32 %v1797, 0.6931472
    %v1799 = vadd.f32 %v1656, %v1768
    %v1800 = vadd.f32 %v1658, %v1770
    %v1801 = vadd.f32 %v1660, %v1772
    %v1802 = vadd.f32 %v1662, %v1774
    %v1803 = vadd.f32 %v1664, %v1776
    %v1804 = vadd.f32 %v1666, %v1778
    %v1805 = vadd.f32 %v1668, %v1780
    %v1806 = vadd.f32 %v1670, %v1782
    %v1807 = vadd.f32 %v1672, %v1784
    %v1808 = vadd.f32 %v1674, %v1786
    %v1809 = vadd.f32 %v1676, %v1788
    %v1810 = vadd.f32 %v1678, %v1790
    %v1811 = vadd.f32 %v1680, %v1792
    %v1812 = vadd.f32 %v1682, %v1794
    %v1813 = vadd.f32 %v1684, %v1796
    %v1814 = vadd.f32 %v1686, %v1798
    %v1815 = vsub.f32 %v1593, %v1799
    %v1816 = vsub.f32 %v1596, %v1800
    %v1817 = vsub.f32 %v1601, %v1801
    %v1818 = vsub.f32 %v1604, %v1802
    %v1819 = vsub.f32 %v1609, %v1803
    %v1820 = vsub.f32 %v1612, %v1804
    %v1821 = vsub.f32 %v1617, %v1805
    %v1822 = vsub.f32 %v1620, %v1806
    %v1823 = vsub.f32 %v1625, %v1807
    %v1824 = vsub.f32 %v1628, %v1808
    %v1825 = vsub.f32 %v1633, %v1809
    %v1826 = vsub.f32 %v1636, %v1810
    %v1827 = vsub.f32 %v1641, %v1811
    %v1828 = vsub.f32 %v1644, %v1812
    %v1829 = vsub.f32 %v1649, %v1813
    %v1830 = vsub.f32 %v1652, %v1814
    %1831 = vst [vmem:[#allocation10] sm:$0xff] %v1815
    %1832 = vst [vmem:[#allocation10 + $0x8] sm:$0xff] %v1816
    %1833 = vst [vmem:[#allocation10 + $0x10] sm:$0xff] %v1817
    %1834 = vst [vmem:[#allocation10 + $0x18] sm:$0xff] %v1818
    %1835 = vst [vmem:[#allocation10 + $0x20] sm:$0xff] %v1819
    %1836 = vst [vmem:[#allocation10 + $0x28] sm:$0xff] %v1820
    %1837 = vst [vmem:[#allocation10 + $0x30] sm:$0xff] %v1821
    %1838 = vst [vmem:[#allocation10 + $0x38] sm:$0xff] %v1822
    %1839 = vst [vmem:[#allocation10 + $0x40] sm:$0xff] %v1823
    %1840 = vst [vmem:[#allocation10 + $0x48] sm:$0xff] %v1824
    %1841 = vst [vmem:[#allocation10 + $0x50] sm:$0xff] %v1825
    %1842 = vst [vmem:[#allocation10 + $0x58] sm:$0xff] %v1826
    %1843 = vst [vmem:[#allocation10 + $0x60] sm:$0xff] %v1827
    %1844 = vst [vmem:[#allocation10 + $0x68] sm:$0xff] %v1828
    %1845 = vst [vmem:[#allocation10 + $0x70] sm:$0xff] %v1829
    %1846 = vst [vmem:[#allocation10 + $0x78] sm:$0xff] %v1830
    // Predicated region
    $region34: #{_forward_padded.1} parent=1 // pred_check
      _
    $region35: #{_forward_padded.1} parent=1 // pred_check_branch
      %1848 = sbr.rel (0) target = $region37
    $region36: #{_forward_padded.1} parent=1 // pred_region
      %s1850 = ssub.s32 2048, 2048
      %1851 = vsyncadd [#allocation4], %s1850
      %s1852 = sshll.u32 [#allocation10], 4
      %s1853 = int_to_ptr.vmem [resolvable:$true] %s1852
      %1858 = dma.vmem_to_hbm [thread:$0]  %s1853, 2048, %s4, [#allocation4], 128, 128, 8
    $region37: #{_forward_padded.1} parent=1 // pred_fallthru
      _
    // Predicated region
    $region38: #{_forward_padded.1} parent=1 // pred_check
      _
    $region39: #{_forward_padded.1} parent=1 // pred_check_branch
      %1860 = sbr.rel (0) target = $region41
    $region40: #{_forward_padded.1} parent=1 // pred_region
      %1861 = dma.done [#allocation4], 2048
    $region41: #{_forward_padded.1} parent=1 // pred_fallthru
      _
    %1862 = vsyncpa [#allocation3], 1
    %1863 = vsyncpa [#allocation6], 1
    %1864 = vsyncpa [#allocation9], 1
    %1865 = vsyncpa [#allocation4], 1

</llo_original>
